<compile_context>
chip_gen: v5e
topology: v5e:2x2
jax: 0.10.0
libtpu: 0.0.40
codegen_flags: <defaults>
</compile_context>

<pallas_src>
import functools

import jax
import jax.numpy as jnp
from jax.experimental import pallas as pl
from jax.experimental.pallas import tpu as pltpu

D_COEFF = 0.01      # self.d_coeff
DT = 1.0            # self.dt
LN_EPS = 1e-5       # nn.LayerNorm default eps

_LANE = 128
_SUBLANE = 8


def _round_up(a, m):
    return (a + m - 1) // m * m


# ---------------- shared math (kernel + reference + wrapper) ----------------

def _softplus(x):
    # numerically stable softplus == torch.nn.Softplus()
    return jnp.maximum(x, 0.0) + jnp.log1p(jnp.exp(-jnp.abs(x)))


def _layernorm(h):
    # nn.LayerNorm(dim, elementwise_affine=False): biased variance, last dim.
    # Exact two-pass form kept for parity with the PyTorch reference.
    mean = jnp.mean(h, axis=-1, keepdims=True)
    var = jnp.mean((h - mean) ** 2, axis=-1, keepdims=True)
    return (h - mean) * jax.lax.rsqrt(var + LN_EPS)


def _linear(x, w_ref, b_ref, matmul_dtype):
    w = w_ref[...]
    if w.dtype != matmul_dtype:           # weights are pre-cast in the wrapper
        w = w.astype(matmul_dtype)
    acc = jnp.dot(x.astype(matmul_dtype), w, preferred_element_type=jnp.float32)
    return acc + b_ref[...]


def _linear_relu(x, w_ref, b_ref, matmul_dtype):
    # LinearReLU: Linear -> LayerNorm(no affine) -> ReLU
    return jnp.maximum(_layernorm(_linear(x, w_ref, b_ref, matmul_dtype)), 0.0)


# ---------------- the Pallas kernel ----------------

def _vicdyf_kernel(
    x_ref, eps_z_ref, eps_d_ref,
    ez_w0, ez_b0, ez_w1, ez_b1, ez_wh, ez_bh,
    ed_w0, ed_b0, ed_w1, ed_b1, ed_wh, ed_bh,
    dc_w0, dc_b0, dc_w1, dc_b1, dc_wld, dc_bld,
    gamma_ref, inv_beta_ref,
    zslab_out, px_out, pu_out,
    *, zp, matmul_dtype,
):
    lin = functools.partial(_linear, matmul_dtype=matmul_dtype)
    lrelu = functools.partial(_linear_relu, matmul_dtype=matmul_dtype)

    x = x_ref[...]
    tn = x.shape[0]

    # ---- enc_z: LinearReLU -> LinearReLU -> fused [mu | logvar] head ----
    h = lrelu(x, ez_w0, ez_b0)
    h = lrelu(h, ez_w1, ez_b1)
    heads = lin(h, ez_wh, ez_bh)                  # (TN, 2*zp), zp = 128-aligned
    qz_mu = heads[:, :zp]                         # vreg-boundary split (no XLU)
    qz_scale = _softplus(heads[:, zp:])
    z = qz_mu + qz_scale * eps_z_ref[...]         # qz.rsample(); padded lanes stay 0

    # ---- enc_d on z (padded z lanes hit zero-padded weight rows -> exact) ----
    h = lrelu(z, ed_w0, ed_b0)
    h = lrelu(h, ed_w1, ed_b1)
    heads_d = lin(h, ed_wh, ed_bh)                # (TN, 2*zp)
    qd_mu = heads_d[:, :zp]
    qd_scale = _softplus(heads_d[:, zp:])
    d = D_COEFF * (qd_mu + qd_scale * eps_d_ref[...])   # d_coeff * qd.rsample()

    # ---- dec_z on stacked [z ; z+d ; z-d]: one matmul chain instead of 3 ----
    zz = jnp.concatenate([z, z + d, z - d], axis=0)      # (3*TN, zp)
    h = lrelu(zz, dc_w0, dc_b0)
    h = lrelu(h, dc_w1, dc_b1)
    ld = _softplus(lin(h, dc_wld, dc_bld))               # (3*TN, xp)
    px_z_ld = ld[:tn]
    diff_px_zd_ld = ld[tn:2 * tn] - ld[2 * tn:]          # pxd_zd_ld - pxmd_zd_ld

    # gamma / 1/beta precomputed in the wrapper: only a multiply here
    pu_zd_ld = _softplus(diff_px_zd_ld + px_z_ld * gamma_ref[...]) * inv_beta_ref[...]

    # ---- lane-dense, 128-aligned writebacks (no masked stores, no shuffles) ----
    zslab_out[:, 0 * zp:1 * zp] = z
    zslab_out[:, 1 * zp:2 * zp] = d
    zslab_out[:, 2 * zp:3 * zp] = qz_mu
    zslab_out[:, 3 * zp:4 * zp] = qz_scale
    zslab_out[:, 4 * zp:5 * zp] = qd_mu
    zslab_out[:, 5 * zp:6 * zp] = qd_scale
    px_out[...] = px_z_ld
    pu_out[...] = pu_zd_ld


# ---------------- VMEM / tiling helpers ----------------

def _vmem_capacity_bytes():
    try:
        return int(pltpu.get_tpu_info().vmem_capacity_bytes)
    except Exception:
        return 64 * 1024 * 1024   # conservative (v7x per-core)


def _padded_tile_bytes(shape, itemsize):
    """Physical VMEM footprint of a tile: (8,128)-padded last two dims."""
    rows = shape[-2] if len(shape) >= 2 else 1
    cols = shape[-1]
    lead = 1
    for s in shape[:-2]:
        lead *= int(s)
    return lead * _round_up(int(rows), _SUBLANE) * _round_up(int(cols), _LANE) * itemsize


def _pick_block_n(x_dim, zp, xp, h_dims, weight_bytes):
    """Pick a batch tile (multiple of 128) from an (8,128)-padded footprint model."""
    cap = _vmem_capacity_bytes()
    budget = int(cap * 0.55) - weight_bytes
    budget = max(budget, 2 * 1024 * 1024)
    xin = _round_up(x_dim, _LANE)                 # physical lane padding of x tile
    # double-buffered grid-varying I/O (f32): x, eps_z, eps_d, zslab, px, pu
    io_per_row = 2 * 4 * (xin + 2 * zp) + 2 * 4 * (6 * zp + 2 * xp)
    # rough in-kernel live intermediates per row (decoder runs on 3x rows)
    hz, hd, hdec = (_round_up(h, _LANE) for h in h_dims)
    work_per_row = 4 * (xin + 2 * hz + 2 * hd + 3 * hdec + 3 * xp + 10 * zp)
    raw = budget // max(io_per_row + work_per_row, 1)
    if raw >= _LANE:
        return int(min(1024, (raw // _LANE) * _LANE))     # multiple of 128
    # degenerate (enormous x_dim): fall back to a multiple of 8 that fits
    return int(max(_SUBLANE, (raw // _SUBLANE) * _SUBLANE))


_SINGLE_BUF_WEIGHTS = None


def _single_buffer_supported():
    """Probe once whether pipeline_mode=pl.Buffered(1) lowers on this backend."""
    global _SINGLE_BUF_WEIGHTS
    if _SINGLE_BUF_WEIGHTS is None:
        try:
            w = jnp.zeros((8, 128), jnp.float32)

            def k(w_ref, o_ref):
                o_ref[...] = w_ref[...] + 1.0

            out = pl.pallas_call(
                k,
                out_shape=jax.ShapeDtypeStruct((8, 128), jnp.float32),
                grid=(2,),
                in_specs=[pl.BlockSpec((8, 128), lambda i: (0, 0),
                                       pipeline_mode=pl.Buffered(1))],
                out_specs=pl.BlockSpec((8, 128), lambda i: (0, 0)),
            )(w)
            jax.block_until_ready(out)
            _SINGLE_BUF_WEIGHTS = True
        except Exception:
            _SINGLE_BUF_WEIGHTS = False
    return _SINGLE_BUF_WEIGHTS


# ---------------- weight preparation (fuse heads, lane-pad, hoist transcendentals) ----------------

def _prep_operands(params, x_dim, z_dim, matmul_dtype):
    (ez_w0, ez_b0, ez_w1, ez_b1, ez_wmu, ez_bmu, ez_wlv, ez_blv,
     ed_w0, ed_b0, ed_w1, ed_b1, ed_wmu, ed_bmu, ed_wlv, ed_blv,
     dc_w0, dc_b0, dc_w1, dc_b1, dc_wld, dc_bld,
     loggamma, logbeta) = params

    zp = _round_up(z_dim, _LANE)
    xp = _round_up(x_dim, _LANE)
    f32 = jnp.float32

    def row2(b):                                  # 1-D bias -> (1, out)
        return jnp.asarray(b, f32).reshape(1, -1)

    def fuse_head(wmu, bmu, wlv, blv):
        # [mu | logvar] head laid out at 2*zp lanes: mu at 0..z_dim,
        # logvar at zp..zp+z_dim, zeros elsewhere -> lane-aligned split.
        hdim = wmu.shape[0]
        w = jnp.zeros((hdim, 2 * zp), f32)
        w = w.at[:, :z_dim].set(jnp.asarray(wmu, f32))
        w = w.at[:, zp:zp + z_dim].set(jnp.asarray(wlv, f32))
        b = jnp.zeros((1, 2 * zp), f32)
        b = b.at[:, :z_dim].set(row2(bmu))
        b = b.at[:, zp:zp + z_dim].set(row2(blv))
        return w, b

    def pad_in_rows(w):                           # (z_dim, h) -> (zp, h), zero rows
        return jnp.zeros((zp, w.shape[1]), f32).at[:z_dim].set(jnp.asarray(w, f32))

    ez_wh, ez_bh = fuse_head(ez_wmu, ez_bmu, ez_wlv, ez_blv)
    ed_wh, ed_bh = fuse_head(ed_wmu, ed_bmu, ed_wlv, ed_blv)
    ed_w0p = pad_in_rows(ed_w0)
    dc_w0p = pad_in_rows(dc_w0)
    dc_wldp = jnp.zeros((dc_wld.shape[0], xp), f32).at[:, :x_dim].set(
        jnp.asarray(dc_wld, f32))
    dc_bldp = jnp.zeros((1, xp), f32).at[:, :x_dim].set(row2(dc_bld))

    # Hoisted transcendentals (once per call, not per tile); zero-padded lanes.
    gamma = jnp.zeros((1, xp), f32).at[:, :x_dim].set(
        _softplus(jnp.asarray(loggamma, f32)).reshape(1, -1))
    inv_beta = jnp.zeros((1, xp), f32).at[:, :x_dim].set(
        (1.0 / (_softplus(jnp.asarray(logbeta, f32)) * DT)).reshape(1, -1))

    def mm(w):                                    # pre-cast matmul operands once
        return jnp.asarray(w, f32).astype(matmul_dtype)

    weights = [
        mm(ez_w0), row2(ez_b0), mm(ez_w1), row2(ez_b1), mm(ez_wh), ez_bh,
        mm(ed_w0p), row2(ed_b0), mm(ed_w1), row2(ed_b1), mm(ed_wh), ed_bh,
        mm(dc_w0p), row2(dc_b0), mm(dc_w1), row2(dc_b1), mm(dc_wldp), dc_bldp,
        gamma, inv_beta,
    ]
    h_dims = (ez_w0.shape[1], ed_w0.shape[1], dc_w0.shape[1])
    return weights, h_dims, zp, xp


# ---------------- public wrapper ----------------

def vicdyf_forward(x, eps_z, eps_d, params, *, block_n=None,
                   matmul_dtype=jnp.float32,
                   dimension_semantics=("parallel",)):
    """VicDyf.forward.

    Returns (z, d, qz_mu, qz_scale, qd_mu, qd_scale, px_z_ld, pu_zd_ld).
    qz = Normal(qz_mu, qz_scale) and qd = Normal(qd_mu, qd_scale) are returned
    as their (loc, scale) tensors.  eps_z / eps_d are the rsample() noise.

    On v7x pass dimension_semantics=(pltpu.CORE_PARALLEL,) to shard batch
    tiles across both TensorCores; the default "parallel" is safe everywhere.
    """
    N, x_dim = x.shape
    z_dim = eps_z.shape[1]

    weights, h_dims, zp, xp = _prep_operands(params, x_dim, z_dim, matmul_dtype)

    # Zero-pad the (tiny) noise inputs to the lane-aligned z width so z/d padded
    # lanes are exactly zero; downstream zero-padded weight rows keep it exact.
    if zp != z_dim:
        eps_z = jnp.zeros((N, zp), jnp.float32).at[:, :z_dim].set(eps_z)
        eps_d = jnp.zeros((N, zp), jnp.float32).at[:, :z_dim].set(eps_d)

    single_buf = _single_buffer_supported()
    nbuf = 1 if single_buf else 2
    weight_bytes = sum(nbuf * _padded_tile_bytes(w.shape, w.dtype.itemsize)
                       for w in weights)

    tn_target = int(block_n) if block_n is not None else _pick_block_n(
        x_dim, zp, xp, h_dims, weight_bytes)
    # Small batches: one tile equal to the full batch dim (always legal, no
    # raggedness).  Large batches: 128-multiple tiles; a ragged last tile is
    # handled by Pallas boundary masking -- no wrapper-side batch pad.
    tn = N if N <= tn_target else tn_target
    grid = (pl.cdiv(N, tn),)

    def tiled(dim):
        return pl.BlockSpec((tn, dim), lambda i: (i, 0))

    if single_buf:
        def resident(w):      # constant block -> VMEM-resident, single-buffered
            return pl.BlockSpec(w.shape, lambda i: (0, 0),
                                pipeline_mode=pl.Buffered(1))
    else:
        def resident(w):
            return pl.BlockSpec(w.shape, lambda i: (0, 0))

    in_specs = [tiled(x_dim), tiled(zp), tiled(zp)] + [resident(w) for w in weights]

    out_shapes = (
        jax.ShapeDtypeStruct((N, 6 * zp), jnp.float32),   # z|d|mu|scale slab
        jax.ShapeDtypeStruct((N, xp), jnp.float32),       # px_z_ld (lane-padded)
        jax.ShapeDtypeStruct((N, xp), jnp.float32),       # pu_zd_ld (lane-padded)
    )
    out_specs = (tiled(6 * zp), tiled(xp), tiled(xp))

    cap = _vmem_capacity_bytes()
    vmem_limit = min(int(cap * 0.95), 120 * 1024 * 1024)

    kernel = functools.partial(_vicdyf_kernel, zp=zp, matmul_dtype=matmul_dtype)

    zslab, px, pu = pl.pallas_call(
        kernel,
        out_shape=out_shapes,
        grid=grid,
        in_specs=in_specs,
        out_specs=out_specs,
        compiler_params=pltpu.CompilerParams(
            dimension_semantics=dimension_semantics,
            vmem_limit_bytes=vmem_limit,
        ),
    )(x, eps_z, eps_d, *weights)

    z = zslab[:, 0 * zp:0 * zp + z_dim]
    d = zslab[:, 1 * zp:1 * zp + z_dim]
    qz_mu = zslab[:, 2 * zp:2 * zp + z_dim]
    qz_scale = zslab[:, 3 * zp:3 * zp + z_dim]
    qd_mu = zslab[:, 4 * zp:4 * zp + z_dim]
    qd_scale = zslab[:, 5 * zp:5 * zp + z_dim]
    return (z, d, qz_mu, qz_scale, qd_mu, qd_scale,
            px[:, :x_dim], pu[:, :x_dim])


# ---------------- pure-JAX reference (mirrors the PyTorch module) ----------------

def vicdyf_reference(x, eps_z, eps_d, params):
    (ez_w0, ez_b0, ez_w1, ez_b1, ez_wmu, ez_bmu, ez_wlv, ez_blv,
     ed_w0, ed_b0, ed_w1, ed_b1, ed_wmu, ed_bmu, ed_wlv, ed_blv,
     dc_w0, dc_b0, dc_w1, dc_b1, dc_wld, dc_bld,
     loggamma, logbeta) = params

    def lin(a, w, b):
        return jnp.dot(a, w, precision="highest") + b

    def lrelu(a, w, b):
        return jnp.maximum(_layernorm(lin(a, w, b)), 0.0)

    def encoder(a, w0, b0, w1, b1, wmu, bmu, wlv, blv):
        h = lrelu(a, w0, b0)
        h = lrelu(h, w1, b1)
        return lin(h, wmu, bmu), lin(h, wlv, blv)

    def decoder(zz):
        h = lrelu(zz, dc_w0, dc_b0)
        h = lrelu(h, dc_w1, dc_b1)
        return _softplus(lin(h, dc_wld, dc_bld))

    qz_mu, qz_logvar = encoder(x, ez_w0, ez_b0, ez_w1, ez_b1,
                               ez_wmu, ez_bmu, ez_wlv, ez_blv)
    qz_scale = _softplus(qz_logvar)
    z = qz_mu + qz_scale * eps_z
    qd_mu, qd_logvar = encoder(z, ed_w0, ed_b0, ed_w1, ed_b1,
                               ed_wmu, ed_bmu, ed_wlv, ed_blv)
    qd_scale = _softplus(qd_logvar)
    d = D_COEFF * (qd_mu + qd_scale * eps_d)
    px_z_ld = decoder(z)
    diff = decoder(z + d) - decoder(z - d)
    gamma = _softplus(loggamma)
    beta = _softplus(logbeta) * DT
    pu_zd_ld = _softplus(diff + px_z_ld * gamma) / beta
    return z, d, qz_mu, qz_scale, qd_mu, qd_scale, px_z_ld, pu_zd_ld


# ---------------- deterministic parameter construction ----------------

def init_params(key, x_dim, z_dim, enc_z_h, enc_d_h, dec_z_h):
    keys = iter(jax.random.split(key, 32))

    def lin(in_d, out_d):
        w = jax.random.normal(next(keys), (in_d, out_d), jnp.float32) / jnp.sqrt(
            jnp.float32(in_d))
        b = 0.01 * jax.random.normal(next(keys), (out_d,), jnp.float32)
        return [w, b]

    p = []
    # enc_z: x2h, seq_nn (1 layer), h2mu, h2logvar
    p += lin(x_dim, enc_z_h); p += lin(enc_z_h, enc_z_h)
    p += lin(enc_z_h, z_dim); p += lin(enc_z_h, z_dim)
    # enc_d: z2h, seq_nn (1 layer), h2mu, h2logvar
    p += lin(z_dim, enc_d_h); p += lin(enc_d_h, enc_d_h)
    p += lin(enc_d_h, z_dim); p += lin(enc_d_h, z_dim)
    # dec_z: z2h, seq_nn (1 layer), h2ld
    p += lin(z_dim, dec_z_h); p += lin(dec_z_h, dec_z_h)
    p += lin(dec_z_h, x_dim)
    # loggamma / logbeta ~ init.normal_ (1D, like the PyTorch Parameters)
    p.append(jax.random.normal(next(keys), (x_dim,), jnp.float32))
    p.append(jax.random.normal(next(keys), (x_dim,), jnp.float32))
    return tuple(p)


# ---------------- demo ----------------

if __name__ == "__main__":
    N, X_DIM, Z_DIM = 8, 32, 8
    ENC_Z_H, ENC_D_H, DEC_Z_H = 32, 32, 32

    key = jax.random.PRNGKey(0)
    k_x, k_ez, k_ed, k_p = jax.random.split(key, 4)

    x = jax.random.normal(k_x, (N, X_DIM), jnp.float32)
    eps_z = jax.random.normal(k_ez, (N, Z_DIM), jnp.float32)   # qz.rsample noise
    eps_d = jax.random.normal(k_ed, (N, Z_DIM), jnp.float32)   # qd.rsample noise
    params = init_params(k_p, X_DIM, Z_DIM, ENC_Z_H, ENC_D_H, DEC_Z_H)

    outs = jax.block_until_ready(vicdyf_forward(x, eps_z, eps_d, params))
    refs = vicdyf_reference(x, eps_z, eps_d, params)

    names = ("z", "d", "qz_mu", "qz_scale", "qd_mu", "qd_scale",
             "px_z_ld", "pu_zd_ld")
    expected = {
        "z": (N, Z_DIM), "d": (N, Z_DIM), "qz_mu": (N, Z_DIM),
        "qz_scale": (N, Z_DIM), "qd_mu": (N, Z_DIM), "qd_scale": (N, Z_DIM),
        "px_z_ld": (N, X_DIM), "pu_zd_ld": (N, X_DIM),
    }
    for name, got, ref in zip(names, outs, refs):
        assert got.shape == expected[name], (name, got.shape)
        assert bool(jnp.all(jnp.isfinite(got))), name
        err = float(jnp.max(jnp.abs(got - ref)))
        assert err < 5e-2, (name, err)

    print("KERNEL_OK")
</pallas_src>

<mosaic_0001>
module attributes {stable_mosaic.version = 11 : i64} {
  func.func @k(%arg0: i32, %arg1: memref<8x128xf32, #tpu.memory_space<vmem>>, %arg2: memref<8x128xf32, #tpu.memory_space<vmem>>) attributes {dimension_semantics = [#tpu.dimension_semantics<arbitrary>], iteration_bounds = array<i64: 2>, scalar_prefetch = 0 : i64, scratch_operands = 0 : i64, tpu.core_type = #tpu.core_type<tc>, window_params = [{pipeline_mode = #tpu.pipeline_mode<synchronous>, transform_indices = @transform_0, window_bounds = array<i64: 8, 128>}, {pipeline_mode = #tpu.pipeline_mode<synchronous>, transform_indices = @transform_1, window_bounds = array<i64: 8, 128>}]} {
    %c0 = arith.constant 0 : index
    %c0_0 = arith.constant 0 : index
    %0 = vector.load %arg1[%c0, %c0_0] : memref<8x128xf32, #tpu.memory_space<vmem>>, vector<8x128xf32>
    %cst = arith.constant 1.000000e+00 : f32
    %1 = vector.broadcast %cst : f32 to vector<8x128xf32>
    %2 = arith.addf %0, %1 : vector<8x128xf32>
    %c0_1 = arith.constant 0 : index
    %c0_2 = arith.constant 0 : index
    %3 = vector.load %arg2[%c0_1, %c0_2] : memref<8x128xf32, #tpu.memory_space<vmem>>, vector<8x128xf32>
    tpu.vector_store %arg2[%c0_1, %c0_2], %2 {strides = array<i32>} : memref<8x128xf32, #tpu.memory_space<vmem>>, vector<8x128xf32>,
    return
  }
  func.func @transform_0(%arg0: i32) -> (i32, i32) {
    %c0_i32 = arith.constant 0 : i32
    %c0_i32_0 = arith.constant 0 : i32
    %c0_i32_1 = arith.constant 0 : i32
    return %c0_i32, %c0_i32_0 : i32, i32
  }
  func.func @transform_1(%arg0: i32) -> (i32, i32) {
    %c0_i32 = arith.constant 0 : i32
    %c0_i32_0 = arith.constant 0 : i32
    %c0_i32_1 = arith.constant 0 : i32
    return %c0_i32, %c0_i32_0 : i32, i32
  }
}

module attributes {stable_mosaic.version = 11 : i64} {
  func.func @_vicdyf_kernel(%arg0: i32, %arg1: memref<8x32xf32, #tpu.memory_space<vmem>>, %arg2: memref<8x128xf32, #tpu.memory_space<vmem>>, %arg3: memref<8x128xf32, #tpu.memory_space<vmem>>, %arg4: memref<32x32xf32, #tpu.memory_space<vmem>>, %arg5: memref<1x32xf32, #tpu.memory_space<vmem>>, %arg6: memref<32x32xf32, #tpu.memory_space<vmem>>, %arg7: memref<1x32xf32, #tpu.memory_space<vmem>>, %arg8: memref<32x256xf32, #tpu.memory_space<vmem>>, %arg9: memref<1x256xf32, #tpu.memory_space<vmem>>, %arg10: memref<128x32xf32, #tpu.memory_space<vmem>>, %arg11: memref<1x32xf32, #tpu.memory_space<vmem>>, %arg12: memref<32x32xf32, #tpu.memory_space<vmem>>, %arg13: memref<1x32xf32, #tpu.memory_space<vmem>>, %arg14: memref<32x256xf32, #tpu.memory_space<vmem>>, %arg15: memref<1x256xf32, #tpu.memory_space<vmem>>, %arg16: memref<128x32xf32, #tpu.memory_space<vmem>>, %arg17: memref<1x32xf32, #tpu.memory_space<vmem>>, %arg18: memref<32x32xf32, #tpu.memory_space<vmem>>, %arg19: memref<1x32xf32, #tpu.memory_space<vmem>>, %arg20: memref<32x128xf32, #tpu.memory_space<vmem>>, %arg21: memref<1x128xf32, #tpu.memory_space<vmem>>, %arg22: memref<1x128xf32, #tpu.memory_space<vmem>>, %arg23: memref<1x128xf32, #tpu.memory_space<vmem>>, %arg24: memref<8x768xf32, #tpu.memory_space<vmem>>, %arg25: memref<8x128xf32, #tpu.memory_space<vmem>>, %arg26: memref<8x128xf32, #tpu.memory_space<vmem>>) attributes {dimension_semantics = [#tpu.dimension_semantics<parallel>], iteration_bounds = array<i64: 1>, scalar_prefetch = 0 : i64, scratch_operands = 0 : i64, tpu.core_type = #tpu.core_type<tc>, window_params = [{transform_indices = @transform_0, window_bounds = array<i64: 8, 32>}, {transform_indices = @transform_1, window_bounds = array<i64: 8, 128>}, {transform_indices = @transform_2, window_bounds = array<i64: 8, 128>}, {pipeline_mode = #tpu.pipeline_mode<synchronous>, transform_indices = @transform_3, window_bounds = array<i64: 32, 32>}, {pipeline_mode = #tpu.pipeline_mode<synchronous>, transform_indices = @transform_4, window_bounds = array<i64: 1, 32>}, {pipeline_mode = #tpu.pipeline_mode<synchronous>, transform_indices = @transform_5, window_bounds = array<i64: 32, 32>}, {pipeline_mode = #tpu.pipeline_mode<synchronous>, transform_indices = @transform_6, window_bounds = array<i64: 1, 32>}, {pipeline_mode = #tpu.pipeline_mode<synchronous>, transform_indices = @transform_7, window_bounds = array<i64: 32, 256>}, {pipeline_mode = #tpu.pipeline_mode<synchronous>, transform_indices = @transform_8, window_bounds = array<i64: 1, 256>}, {pipeline_mode = #tpu.pipeline_mode<synchronous>, transform_indices = @transform_9, window_bounds = array<i64: 128, 32>}, {pipeline_mode = #tpu.pipeline_mode<synchronous>, transform_indices = @transform_10, window_bounds = array<i64: 1, 32>}, {pipeline_mode = #tpu.pipeline_mode<synchronous>, transform_indices = @transform_11, window_bounds = array<i64: 32, 32>}, {pipeline_mode = #tpu.pipeline_mode<synchronous>, transform_indices = @transform_12, window_bounds = array<i64: 1, 32>}, {pipeline_mode = #tpu.pipeline_mode<synchronous>, transform_indices = @transform_13, window_bounds = array<i64: 32, 256>}, {pipeline_mode = #tpu.pipeline_mode<synchronous>, transform_indices = @transform_14, window_bounds = array<i64: 1, 256>}, {pipeline_mode = #tpu.pipeline_mode<synchronous>, transform_indices = @transform_15, window_bounds = array<i64: 128, 32>}, {pipeline_mode = #tpu.pipeline_mode<synchronous>, transform_indices = @transform_16, window_bounds = array<i64: 1, 32>}, {pipeline_mode = #tpu.pipeline_mode<synchronous>, transform_indices = @transform_17, window_bounds = array<i64: 32, 32>}, {pipeline_mode = #tpu.pipeline_mode<synchronous>, transform_indices = @transform_18, window_bounds = array<i64: 1, 32>}, {pipeline_mode = #tpu.pipeline_mode<synchronous>, transform_indices = @transform_19, window_bounds = array<i64: 32, 128>}, {pipeline_mode = #tpu.pipeline_mode<synchronous>, transform_indices = @transform_20, window_bounds = array<i64: 1, 128>}, {pipeline_mode = #tpu.pipeline_mode<synchronous>, transform_indices = @transform_21, window_bounds = array<i64: 1, 128>}, {pipeline_mode = #tpu.pipeline_mode<synchronous>, transform_indices = @transform_22, window_bounds = array<i64: 1, 128>}, {transform_indices = @transform_23, window_bounds = array<i64: 8, 768>}, {transform_indices = @transform_24, window_bounds = array<i64: 8, 128>}, {transform_indices = @transform_25, window_bounds = array<i64: 8, 128>}]} {
    %c0 = arith.constant 0 : index
    %c0_0 = arith.constant 0 : index
    %0 = vector.load %arg1[%c0, %c0_0] : memref<8x32xf32, #tpu.memory_space<vmem>>, vector<8x32xf32>
    %c0_1 = arith.constant 0 : index
    %c0_2 = arith.constant 0 : index
    %1 = vector.load %arg4[%c0_1, %c0_2] : memref<32x32xf32, #tpu.memory_space<vmem>>, vector<32x32xf32>
    %cst = arith.constant dense<0.000000e+00> : vector<8x32xf32>
    %2 = tpu.matmul %0, %1, %cst {dimension_numbers = #tpu.dot_dimension_numbers<[1], [0], [0], [1], [0, 0, 1, 1], [], []>} : vector<8x32xf32>, vector<32x32xf32>, vector<8x32xf32> -> vector<8x32xf32>
    %c0_3 = arith.constant 0 : index
    %c0_4 = arith.constant 0 : index
    %3 = vector.load %arg5[%c0_3, %c0_4] : memref<1x32xf32, #tpu.memory_space<vmem>>, vector<1x32xf32>
    %4 = vector.broadcast %3 : vector<1x32xf32> to vector<8x32xf32>
    %5 = arith.addf %2, %4 : vector<8x32xf32>
    %cst_5 = arith.constant dense<0.000000e+00> : vector<8xf32>
    %6 = vector.multi_reduction <add>, %5, %cst_5 [1] : vector<8x32xf32> to vector<8xf32>
    %7 = vector.shape_cast %6 : vector<8xf32> to vector<8x1xf32>
    %cst_6 = arith.constant 3.200000e+01 : f32
    %8 = vector.broadcast %cst_6 : f32 to vector<8x1xf32>
    %9 = arith.divf %7, %8 : vector<8x1xf32>
    %10 = vector.broadcast %9 : vector<8x1xf32> to vector<8x32xf32>
    %11 = arith.subf %5, %10 : vector<8x32xf32>
    %12 = arith.mulf %11, %11 : vector<8x32xf32>
    %cst_7 = arith.constant dense<0.000000e+00> : vector<8xf32>
    %13 = vector.multi_reduction <add>, %12, %cst_7 [1] : vector<8x32xf32> to vector<8xf32>
    %14 = vector.shape_cast %13 : vector<8xf32> to vector<8x1xf32>
    %cst_8 = arith.constant 3.200000e+01 : f32
    %15 = vector.broadcast %cst_8 : f32 to vector<8x1xf32>
    %16 = arith.divf %14, %15 : vector<8x1xf32>
    %17 = vector.broadcast %9 : vector<8x1xf32> to vector<8x32xf32>
    %18 = arith.subf %5, %17 : vector<8x32xf32>
    %cst_9 = arith.constant 9.99999974E-6 : f32
    %19 = vector.broadcast %cst_9 : f32 to vector<8x1xf32>
    %20 = arith.addf %16, %19 : vector<8x1xf32>
    %21 = math.rsqrt %20 : vector<8x1xf32>
    %22 = vector.broadcast %21 : vector<8x1xf32> to vector<8x32xf32>
    %23 = arith.mulf %18, %22 : vector<8x32xf32>
    %cst_10 = arith.constant 0.000000e+00 : f32
    %24 = vector.broadcast %cst_10 : f32 to vector<8x32xf32>
    %25 = arith.maximumf %23, %24 : vector<8x32xf32>
    %c0_11 = arith.constant 0 : index
    %c0_12 = arith.constant 0 : index
    %26 = vector.load %arg6[%c0_11, %c0_12] : memref<32x32xf32, #tpu.memory_space<vmem>>, vector<32x32xf32>
    %cst_13 = arith.constant dense<0.000000e+00> : vector<8x32xf32>
    %27 = tpu.matmul %25, %26, %cst_13 {dimension_numbers = #tpu.dot_dimension_numbers<[1], [0], [0], [1], [0, 0, 1, 1], [], []>} : vector<8x32xf32>, vector<32x32xf32>, vector<8x32xf32> -> vector<8x32xf32>
    %c0_14 = arith.constant 0 : index
    %c0_15 = arith.constant 0 : index
    %28 = vector.load %arg7[%c0_14, %c0_15] : memref<1x32xf32, #tpu.memory_space<vmem>>, vector<1x32xf32>
    %29 = vector.broadcast %28 : vector<1x32xf32> to vector<8x32xf32>
    %30 = arith.addf %27, %29 : vector<8x32xf32>
    %cst_16 = arith.constant dense<0.000000e+00> : vector<8xf32>
    %31 = vector.multi_reduction <add>, %30, %cst_16 [1] : vector<8x32xf32> to vector<8xf32>
    %32 = vector.shape_cast %31 : vector<8xf32> to vector<8x1xf32>
    %cst_17 = arith.constant 3.200000e+01 : f32
    %33 = vector.broadcast %cst_17 : f32 to vector<8x1xf32>
    %34 = arith.divf %32, %33 : vector<8x1xf32>
    %35 = vector.broadcast %34 : vector<8x1xf32> to vector<8x32xf32>
    %36 = arith.subf %30, %35 : vector<8x32xf32>
    %37 = arith.mulf %36, %36 : vector<8x32xf32>
    %cst_18 = arith.constant dense<0.000000e+00> : vector<8xf32>
    %38 = vector.multi_reduction <add>, %37, %cst_18 [1] : vector<8x32xf32> to vector<8xf32>
    %39 = vector.shape_cast %38 : vector<8xf32> to vector<8x1xf32>
    %cst_19 = arith.constant 3.200000e+01 : f32
    %40 = vector.broadcast %cst_19 : f32 to vector<8x1xf32>
    %41 = arith.divf %39, %40 : vector<8x1xf32>
    %42 = vector.broadcast %34 : vector<8x1xf32> to vector<8x32xf32>
    %43 = arith.subf %30, %42 : vector<8x32xf32>
    %cst_20 = arith.constant 9.99999974E-6 : f32
    %44 = vector.broadcast %cst_20 : f32 to vector<8x1xf32>
    %45 = arith.addf %41, %44 : vector<8x1xf32>
    %46 = math.rsqrt %45 : vector<8x1xf32>
    %47 = vector.broadcast %46 : vector<8x1xf32> to vector<8x32xf32>
    %48 = arith.mulf %43, %47 : vector<8x32xf32>
    %cst_21 = arith.constant 0.000000e+00 : f32
    %49 = vector.broadcast %cst_21 : f32 to vector<8x32xf32>
    %50 = arith.maximumf %48, %49 : vector<8x32xf32>
    %c0_22 = arith.constant 0 : index
    %c0_23 = arith.constant 0 : index
    %51 = vector.load %arg8[%c0_22, %c0_23] : memref<32x256xf32, #tpu.memory_space<vmem>>, vector<32x256xf32>
    %cst_24 = arith.constant dense<0.000000e+00> : vector<8x256xf32>
    %52 = tpu.matmul %50, %51, %cst_24 {dimension_numbers = #tpu.dot_dimension_numbers<[1], [0], [0], [1], [0, 0, 1, 1], [], []>} : vector<8x32xf32>, vector<32x256xf32>, vector<8x256xf32> -> vector<8x256xf32>
    %c0_25 = arith.constant 0 : index
    %c0_26 = arith.constant 0 : index
    %53 = vector.load %arg9[%c0_25, %c0_26] : memref<1x256xf32, #tpu.memory_space<vmem>>, vector<1x256xf32>
    %54 = vector.broadcast %53 : vector<1x256xf32> to vector<8x256xf32>
    %55 = arith.addf %52, %54 : vector<8x256xf32>
    %56 = vector.extract_strided_slice %55 {offsets = [0, 0], sizes = [8, 128], strides = [1, 1]} : vector<8x256xf32> to vector<8x128xf32>
    %57 = vector.extract_strided_slice %55 {offsets = [0, 128], sizes = [8, 128], strides = [1, 1]} : vector<8x256xf32> to vector<8x128xf32>
    %cst_27 = arith.constant 0.000000e+00 : f32
    %58 = vector.broadcast %cst_27 : f32 to vector<8x128xf32>
    %59 = arith.maximumf %57, %58 : vector<8x128xf32>
    %60 = math.absf %57 : vector<8x128xf32>
    %cst_28 = arith.constant 0.000000e+00 : f32
    %61 = vector.broadcast %cst_28 : f32 to vector<8x128xf32>
    %62 = arith.subf %61, %60 : vector<8x128xf32>
    %63 = math.exp %62 : vector<8x128xf32>
    %64 = math.log1p %63 : vector<8x128xf32>
    %65 = arith.addf %59, %64 : vector<8x128xf32>
    %c0_29 = arith.constant 0 : index
    %c0_30 = arith.constant 0 : index
    %66 = vector.load %arg2[%c0_29, %c0_30] : memref<8x128xf32, #tpu.memory_space<vmem>>, vector<8x128xf32>
    %67 = arith.mulf %65, %66 : vector<8x128xf32>
    %68 = arith.addf %56, %67 : vector<8x128xf32>
    %c0_31 = arith.constant 0 : index
    %c0_32 = arith.constant 0 : index
    %69 = vector.load %arg10[%c0_31, %c0_32] : memref<128x32xf32, #tpu.memory_space<vmem>>, vector<128x32xf32>
    %cst_33 = arith.constant dense<0.000000e+00> : vector<8x32xf32>
    %70 = tpu.matmul %68, %69, %cst_33 {dimension_numbers = #tpu.dot_dimension_numbers<[1], [0], [0], [1], [0, 0, 1, 1], [], []>} : vector<8x128xf32>, vector<128x32xf32>, vector<8x32xf32> -> vector<8x32xf32>
    %c0_34 = arith.constant 0 : index
    %c0_35 = arith.constant 0 : index
    %71 = vector.load %arg11[%c0_34, %c0_35] : memref<1x32xf32, #tpu.memory_space<vmem>>, vector<1x32xf32>
    %72 = vector.broadcast %71 : vector<1x32xf32> to vector<8x32xf32>
    %73 = arith.addf %70, %72 : vector<8x32xf32>
    %cst_36 = arith.constant dense<0.000000e+00> : vector<8xf32>
    %74 = vector.multi_reduction <add>, %73, %cst_36 [1] : vector<8x32xf32> to vector<8xf32>
    %75 = vector.shape_cast %74 : vector<8xf32> to vector<8x1xf32>
    %cst_37 = arith.constant 3.200000e+01 : f32
    %76 = vector.broadcast %cst_37 : f32 to vector<8x1xf32>
    %77 = arith.divf %75, %76 : vector<8x1xf32>
    %78 = vector.broadcast %77 : vector<8x1xf32> to vector<8x32xf32>
    %79 = arith.subf %73, %78 : vector<8x32xf32>
    %80 = arith.mulf %79, %79 : vector<8x32xf32>
    %cst_38 = arith.constant dense<0.000000e+00> : vector<8xf32>
    %81 = vector.multi_reduction <add>, %80, %cst_38 [1] : vector<8x32xf32> to vector<8xf32>
    %82 = vector.shape_cast %81 : vector<8xf32> to vector<8x1xf32>
    %cst_39 = arith.constant 3.200000e+01 : f32
    %83 = vector.broadcast %cst_39 : f32 to vector<8x1xf32>
    %84 = arith.divf %82, %83 : vector<8x1xf32>
    %85 = vector.broadcast %77 : vector<8x1xf32> to vector<8x32xf32>
    %86 = arith.subf %73, %85 : vector<8x32xf32>
    %cst_40 = arith.constant 9.99999974E-6 : f32
    %87 = vector.broadcast %cst_40 : f32 to vector<8x1xf32>
    %88 = arith.addf %84, %87 : vector<8x1xf32>
    %89 = math.rsqrt %88 : vector<8x1xf32>
    %90 = vector.broadcast %89 : vector<8x1xf32> to vector<8x32xf32>
    %91 = arith.mulf %86, %90 : vector<8x32xf32>
    %cst_41 = arith.constant 0.000000e+00 : f32
    %92 = vector.broadcast %cst_41 : f32 to vector<8x32xf32>
    %93 = arith.maximumf %91, %92 : vector<8x32xf32>
    %c0_42 = arith.constant 0 : index
    %c0_43 = arith.constant 0 : index
    %94 = vector.load %arg12[%c0_42, %c0_43] : memref<32x32xf32, #tpu.memory_space<vmem>>, vector<32x32xf32>
    %cst_44 = arith.constant dense<0.000000e+00> : vector<8x32xf32>
    %95 = tpu.matmul %93, %94, %cst_44 {dimension_numbers = #tpu.dot_dimension_numbers<[1], [0], [0], [1], [0, 0, 1, 1], [], []>} : vector<8x32xf32>, vector<32x32xf32>, vector<8x32xf32> -> vector<8x32xf32>
    %c0_45 = arith.constant 0 : index
    %c0_46 = arith.constant 0 : index
    %96 = vector.load %arg13[%c0_45, %c0_46] : memref<1x32xf32, #tpu.memory_space<vmem>>, vector<1x32xf32>
    %97 = vector.broadcast %96 : vector<1x32xf32> to vector<8x32xf32>
    %98 = arith.addf %95, %97 : vector<8x32xf32>
    %cst_47 = arith.constant dense<0.000000e+00> : vector<8xf32>
    %99 = vector.multi_reduction <add>, %98, %cst_47 [1] : vector<8x32xf32> to vector<8xf32>
    %100 = vector.shape_cast %99 : vector<8xf32> to vector<8x1xf32>
    %cst_48 = arith.constant 3.200000e+01 : f32
    %101 = vector.broadcast %cst_48 : f32 to vector<8x1xf32>
    %102 = arith.divf %100, %101 : vector<8x1xf32>
    %103 = vector.broadcast %102 : vector<8x1xf32> to vector<8x32xf32>
    %104 = arith.subf %98, %103 : vector<8x32xf32>
    %105 = arith.mulf %104, %104 : vector<8x32xf32>
    %cst_49 = arith.constant dense<0.000000e+00> : vector<8xf32>
    %106 = vector.multi_reduction <add>, %105, %cst_49 [1] : vector<8x32xf32> to vector<8xf32>
    %107 = vector.shape_cast %106 : vector<8xf32> to vector<8x1xf32>
    %cst_50 = arith.constant 3.200000e+01 : f32
    %108 = vector.broadcast %cst_50 : f32 to vector<8x1xf32>
    %109 = arith.divf %107, %108 : vector<8x1xf32>
    %110 = vector.broadcast %102 : vector<8x1xf32> to vector<8x32xf32>
    %111 = arith.subf %98, %110 : vector<8x32xf32>
    %cst_51 = arith.constant 9.99999974E-6 : f32
    %112 = vector.broadcast %cst_51 : f32 to vector<8x1xf32>
    %113 = arith.addf %109, %112 : vector<8x1xf32>
    %114 = math.rsqrt %113 : vector<8x1xf32>
    %115 = vector.broadcast %114 : vector<8x1xf32> to vector<8x32xf32>
    %116 = arith.mulf %111, %115 : vector<8x32xf32>
    %cst_52 = arith.constant 0.000000e+00 : f32
    %117 = vector.broadcast %cst_52 : f32 to vector<8x32xf32>
    %118 = arith.maximumf %116, %117 : vector<8x32xf32>
    %c0_53 = arith.constant 0 : index
    %c0_54 = arith.constant 0 : index
    %119 = vector.load %arg14[%c0_53, %c0_54] : memref<32x256xf32, #tpu.memory_space<vmem>>, vector<32x256xf32>
    %cst_55 = arith.constant dense<0.000000e+00> : vector<8x256xf32>
    %120 = tpu.matmul %118, %119, %cst_55 {dimension_numbers = #tpu.dot_dimension_numbers<[1], [0], [0], [1], [0, 0, 1, 1], [], []>} : vector<8x32xf32>, vector<32x256xf32>, vector<8x256xf32> -> vector<8x256xf32>
    %c0_56 = arith.constant 0 : index
    %c0_57 = arith.constant 0 : index
    %121 = vector.load %arg15[%c0_56, %c0_57] : memref<1x256xf32, #tpu.memory_space<vmem>>, vector<1x256xf32>
    %122 = vector.broadcast %121 : vector<1x256xf32> to vector<8x256xf32>
    %123 = arith.addf %120, %122 : vector<8x256xf32>
    %124 = vector.extract_strided_slice %123 {offsets = [0, 0], sizes = [8, 128], strides = [1, 1]} : vector<8x256xf32> to vector<8x128xf32>
    %125 = vector.extract_strided_slice %123 {offsets = [0, 128], sizes = [8, 128], strides = [1, 1]} : vector<8x256xf32> to vector<8x128xf32>
    %cst_58 = arith.constant 0.000000e+00 : f32
    %126 = vector.broadcast %cst_58 : f32 to vector<8x128xf32>
    %127 = arith.maximumf %125, %126 : vector<8x128xf32>
    %128 = math.absf %125 : vector<8x128xf32>
    %cst_59 = arith.constant 0.000000e+00 : f32
    %129 = vector.broadcast %cst_59 : f32 to vector<8x128xf32>
    %130 = arith.subf %129, %128 : vector<8x128xf32>
    %131 = math.exp %130 : vector<8x128xf32>
    %132 = math.log1p %131 : vector<8x128xf32>
    %133 = arith.addf %127, %132 : vector<8x128xf32>
    %c0_60 = arith.constant 0 : index
    %c0_61 = arith.constant 0 : index
    %134 = vector.load %arg3[%c0_60, %c0_61] : memref<8x128xf32, #tpu.memory_space<vmem>>, vector<8x128xf32>
    %135 = arith.mulf %133, %134 : vector<8x128xf32>
    %136 = arith.addf %124, %135 : vector<8x128xf32>
    %cst_62 = arith.constant 0.00999999977 : f32
    %137 = vector.broadcast %cst_62 : f32 to vector<8x128xf32>
    %138 = arith.mulf %137, %136 : vector<8x128xf32>
    %139 = arith.addf %68, %138 : vector<8x128xf32>
    %140 = arith.subf %68, %138 : vector<8x128xf32>
    %141 = tpu.concatenate %68, %139, %140 in 0 : vector<8x128xf32>, vector<8x128xf32>, vector<8x128xf32> -> vector<24x128xf32>
    %c0_63 = arith.constant 0 : index
    %c0_64 = arith.constant 0 : index
    %142 = vector.load %arg16[%c0_63, %c0_64] : memref<128x32xf32, #tpu.memory_space<vmem>>, vector<128x32xf32>
    %cst_65 = arith.constant dense<0.000000e+00> : vector<24x32xf32>
    %143 = tpu.matmul %141, %142, %cst_65 {dimension_numbers = #tpu.dot_dimension_numbers<[1], [0], [0], [1], [0, 0, 1, 1], [], []>} : vector<24x128xf32>, vector<128x32xf32>, vector<24x32xf32> -> vector<24x32xf32>
    %c0_66 = arith.constant 0 : index
    %c0_67 = arith.constant 0 : index
    %144 = vector.load %arg17[%c0_66, %c0_67] : memref<1x32xf32, #tpu.memory_space<vmem>>, vector<1x32xf32>
    %145 = vector.broadcast %144 : vector<1x32xf32> to vector<24x32xf32>
    %146 = arith.addf %143, %145 : vector<24x32xf32>
    %cst_68 = arith.constant dense<0.000000e+00> : vector<24xf32>
    %147 = vector.multi_reduction <add>, %146, %cst_68 [1] : vector<24x32xf32> to vector<24xf32>
    %148 = vector.shape_cast %147 : vector<24xf32> to vector<24x1xf32>
    %cst_69 = arith.constant 3.200000e+01 : f32
    %149 = vector.broadcast %cst_69 : f32 to vector<24x1xf32>
    %150 = arith.divf %148, %149 : vector<24x1xf32>
    %151 = vector.broadcast %150 : vector<24x1xf32> to vector<24x32xf32>
    %152 = arith.subf %146, %151 : vector<24x32xf32>
    %153 = arith.mulf %152, %152 : vector<24x32xf32>
    %cst_70 = arith.constant dense<0.000000e+00> : vector<24xf32>
    %154 = vector.multi_reduction <add>, %153, %cst_70 [1] : vector<24x32xf32> to vector<24xf32>
    %155 = vector.shape_cast %154 : vector<24xf32> to vector<24x1xf32>
    %cst_71 = arith.constant 3.200000e+01 : f32
    %156 = vector.broadcast %cst_71 : f32 to vector<24x1xf32>
    %157 = arith.divf %155, %156 : vector<24x1xf32>
    %158 = vector.broadcast %150 : vector<24x1xf32> to vector<24x32xf32>
    %159 = arith.subf %146, %158 : vector<24x32xf32>
    %cst_72 = arith.constant 9.99999974E-6 : f32
    %160 = vector.broadcast %cst_72 : f32 to vector<24x1xf32>
    %161 = arith.addf %157, %160 : vector<24x1xf32>
    %162 = math.rsqrt %161 : vector<24x1xf32>
    %163 = vector.broadcast %162 : vector<24x1xf32> to vector<24x32xf32>
    %164 = arith.mulf %159, %163 : vector<24x32xf32>
    %cst_73 = arith.constant 0.000000e+00 : f32
    %165 = vector.broadcast %cst_73 : f32 to vector<24x32xf32>
    %166 = arith.maximumf %164, %165 : vector<24x32xf32>
    %c0_74 = arith.constant 0 : index
    %c0_75 = arith.constant 0 : index
    %167 = vector.load %arg18[%c0_74, %c0_75] : memref<32x32xf32, #tpu.memory_space<vmem>>, vector<32x32xf32>
    %cst_76 = arith.constant dense<0.000000e+00> : vector<24x32xf32>
    %168 = tpu.matmul %166, %167, %cst_76 {dimension_numbers = #tpu.dot_dimension_numbers<[1], [0], [0], [1], [0, 0, 1, 1], [], []>} : vector<24x32xf32>, vector<32x32xf32>, vector<24x32xf32> -> vector<24x32xf32>
    %c0_77 = arith.constant 0 : index
    %c0_78 = arith.constant 0 : index
    %169 = vector.load %arg19[%c0_77, %c0_78] : memref<1x32xf32, #tpu.memory_space<vmem>>, vector<1x32xf32>
    %170 = vector.broadcast %169 : vector<1x32xf32> to vector<24x32xf32>
    %171 = arith.addf %168, %170 : vector<24x32xf32>
    %cst_79 = arith.constant dense<0.000000e+00> : vector<24xf32>
    %172 = vector.multi_reduction <add>, %171, %cst_79 [1] : vector<24x32xf32> to vector<24xf32>
    %173 = vector.shape_cast %172 : vector<24xf32> to vector<24x1xf32>
    %cst_80 = arith.constant 3.200000e+01 : f32
    %174 = vector.broadcast %cst_80 : f32 to vector<24x1xf32>
    %175 = arith.divf %173, %174 : vector<24x1xf32>
    %176 = vector.broadcast %175 : vector<24x1xf32> to vector<24x32xf32>
    %177 = arith.subf %171, %176 : vector<24x32xf32>
    %178 = arith.mulf %177, %177 : vector<24x32xf32>
    %cst_81 = arith.constant dense<0.000000e+00> : vector<24xf32>
    %179 = vector.multi_reduction <add>, %178, %cst_81 [1] : vector<24x32xf32> to vector<24xf32>
    %180 = vector.shape_cast %179 : vector<24xf32> to vector<24x1xf32>
    %cst_82 = arith.constant 3.200000e+01 : f32
    %181 = vector.broadcast %cst_82 : f32 to vector<24x1xf32>
    %182 = arith.divf %180, %181 : vector<24x1xf32>
    %183 = vector.broadcast %175 : vector<24x1xf32> to vector<24x32xf32>
    %184 = arith.subf %171, %183 : vector<24x32xf32>
    %cst_83 = arith.constant 9.99999974E-6 : f32
    %185 = vector.broadcast %cst_83 : f32 to vector<24x1xf32>
    %186 = arith.addf %182, %185 : vector<24x1xf32>
    %187 = math.rsqrt %186 : vector<24x1xf32>
    %188 = vector.broadcast %187 : vector<24x1xf32> to vector<24x32xf32>
    %189 = arith.mulf %184, %188 : vector<24x32xf32>
    %cst_84 = arith.constant 0.000000e+00 : f32
    %190 = vector.broadcast %cst_84 : f32 to vector<24x32xf32>
    %191 = arith.maximumf %189, %190 : vector<24x32xf32>
    %c0_85 = arith.constant 0 : index
    %c0_86 = arith.constant 0 : index
    %192 = vector.load %arg20[%c0_85, %c0_86] : memref<32x128xf32, #tpu.memory_space<vmem>>, vector<32x128xf32>
    %cst_87 = arith.constant dense<0.000000e+00> : vector<24x128xf32>
    %193 = tpu.matmul %191, %192, %cst_87 {dimension_numbers = #tpu.dot_dimension_numbers<[1], [0], [0], [1], [0, 0, 1, 1], [], []>} : vector<24x32xf32>, vector<32x128xf32>, vector<24x128xf32> -> vector<24x128xf32>
    %c0_88 = arith.constant 0 : index
    %c0_89 = arith.constant 0 : index
    %194 = vector.load %arg21[%c0_88, %c0_89] : memref<1x128xf32, #tpu.memory_space<vmem>>, vector<1x128xf32>
    %195 = vector.broadcast %194 : vector<1x128xf32> to vector<24x128xf32>
    %196 = arith.addf %193, %195 : vector<24x128xf32>
    %cst_90 = arith.constant 0.000000e+00 : f32
    %197 = vector.broadcast %cst_90 : f32 to vector<24x128xf32>
    %198 = arith.maximumf %196, %197 : vector<24x128xf32>
    %199 = math.absf %196 : vector<24x128xf32>
    %cst_91 = arith.constant 0.000000e+00 : f32
    %200 = vector.broadcast %cst_91 : f32 to vector<24x128xf32>
    %201 = arith.subf %200, %199 : vector<24x128xf32>
    %202 = math.exp %201 : vector<24x128xf32>
    %203 = math.log1p %202 : vector<24x128xf32>
    %204 = arith.addf %198, %203 : vector<24x128xf32>
    %205 = vector.extract_strided_slice %204 {offsets = [0, 0], sizes = [8, 128], strides = [1, 1]} : vector<24x128xf32> to vector<8x128xf32>
    %206 = vector.extract_strided_slice %204 {offsets = [8, 0], sizes = [8, 128], strides = [1, 1]} : vector<24x128xf32> to vector<8x128xf32>
    %207 = vector.extract_strided_slice %204 {offsets = [16, 0], sizes = [8, 128], strides = [1, 1]} : vector<24x128xf32> to vector<8x128xf32>
    %208 = arith.subf %206, %207 : vector<8x128xf32>
    %c0_92 = arith.constant 0 : index
    %c0_93 = arith.constant 0 : index
    %209 = vector.load %arg22[%c0_92, %c0_93] : memref<1x128xf32, #tpu.memory_space<vmem>>, vector<1x128xf32>
    %210 = vector.broadcast %209 : vector<1x128xf32> to vector<8x128xf32>
    %211 = arith.mulf %205, %210 : vector<8x128xf32>
    %212 = arith.addf %208, %211 : vector<8x128xf32>
    %cst_94 = arith.constant 0.000000e+00 : f32
    %213 = vector.broadcast %cst_94 : f32 to vector<8x128xf32>
    %214 = arith.maximumf %212, %213 : vector<8x128xf32>
    %215 = math.absf %212 : vector<8x128xf32>
    %cst_95 = arith.constant 0.000000e+00 : f32
    %216 = vector.broadcast %cst_95 : f32 to vector<8x128xf32>
    %217 = arith.subf %216, %215 : vector<8x128xf32>
    %218 = math.exp %217 : vector<8x128xf32>
    %219 = math.log1p %218 : vector<8x128xf32>
    %220 = arith.addf %214, %219 : vector<8x128xf32>
    %c0_96 = arith.constant 0 : index
    %c0_97 = arith.constant 0 : index
    %221 = vector.load %arg23[%c0_96, %c0_97] : memref<1x128xf32, #tpu.memory_space<vmem>>, vector<1x128xf32>
    %222 = vector.broadcast %221 : vector<1x128xf32> to vector<8x128xf32>
    %223 = arith.mulf %220, %222 : vector<8x128xf32>
    %c0_98 = arith.constant 0 : index
    %c0_99 = arith.constant 0 : index
    %224 = vector.load %arg24[%c0_98, %c0_99] : memref<8x768xf32, #tpu.memory_space<vmem>>, vector<8x128xf32>
    tpu.vector_store %arg24[%c0_98, %c0_99], %68 {strides = array<i32>} : memref<8x768xf32, #tpu.memory_space<vmem>>, vector<8x128xf32>,
    %c0_100 = arith.constant 0 : index
    %c128 = arith.constant 128 : index
    %225 = vector.load %arg24[%c0_100, %c128] : memref<8x768xf32, #tpu.memory_space<vmem>>, vector<8x128xf32>
    tpu.vector_store %arg24[%c0_100, %c128], %138 {strides = array<i32>} : memref<8x768xf32, #tpu.memory_space<vmem>>, vector<8x128xf32>,
    %c0_101 = arith.constant 0 : index
    %c256 = arith.constant 256 : index
    %226 = vector.load %arg24[%c0_101, %c256] : memref<8x768xf32, #tpu.memory_space<vmem>>, vector<8x128xf32>
    tpu.vector_store %arg24[%c0_101, %c256], %56 {strides = array<i32>} : memref<8x768xf32, #tpu.memory_space<vmem>>, vector<8x128xf32>,
    %c0_102 = arith.constant 0 : index
    %c384 = arith.constant 384 : index
    %227 = vector.load %arg24[%c0_102, %c384] : memref<8x768xf32, #tpu.memory_space<vmem>>, vector<8x128xf32>
    tpu.vector_store %arg24[%c0_102, %c384], %65 {strides = array<i32>} : memref<8x768xf32, #tpu.memory_space<vmem>>, vector<8x128xf32>,
    %c0_103 = arith.constant 0 : index
    %c512 = arith.constant 512 : index
    %228 = vector.load %arg24[%c0_103, %c512] : memref<8x768xf32, #tpu.memory_space<vmem>>, vector<8x128xf32>
    tpu.vector_store %arg24[%c0_103, %c512], %124 {strides = array<i32>} : memref<8x768xf32, #tpu.memory_space<vmem>>, vector<8x128xf32>,
    %c0_104 = arith.constant 0 : index
    %c640 = arith.constant 640 : index
    %229 = vector.load %arg24[%c0_104, %c640] : memref<8x768xf32, #tpu.memory_space<vmem>>, vector<8x128xf32>
    tpu.vector_store %arg24[%c0_104, %c640], %133 {strides = array<i32>} : memref<8x768xf32, #tpu.memory_space<vmem>>, vector<8x128xf32>,
    %c0_105 = arith.constant 0 : index
    %c0_106 = arith.constant 0 : index
    %230 = vector.load %arg25[%c0_105, %c0_106] : memref<8x128xf32, #tpu.memory_space<vmem>>, vector<8x128xf32>
    tpu.vector_store %arg25[%c0_105, %c0_106], %205 {strides = array<i32>} : memref<8x128xf32, #tpu.memory_space<vmem>>, vector<8x128xf32>,
    %c0_107 = arith.constant 0 : index
    %c0_108 = arith.constant 0 : index
    %231 = vector.load %arg26[%c0_107, %c0_108] : memref<8x128xf32, #tpu.memory_space<vmem>>, vector<8x128xf32>
    tpu.vector_store %arg26[%c0_107, %c0_108], %223 {strides = array<i32>} : memref<8x128xf32, #tpu.memory_space<vmem>>, vector<8x128xf32>,
    return
  }
  func.func @transform_0(%arg0: i32) -> (i32, i32) {
    %c0_i32 = arith.constant 0 : i32
    %c0_i32_0 = arith.constant 0 : i32
    return %arg0, %c0_i32 : i32, i32
  }
  func.func @transform_1(%arg0: i32) -> (i32, i32) {
    %c0_i32 = arith.constant 0 : i32
    %c0_i32_0 = arith.constant 0 : i32
    return %arg0, %c0_i32 : i32, i32
  }
  func.func @transform_2(%arg0: i32) -> (i32, i32) {
    %c0_i32 = arith.constant 0 : i32
    %c0_i32_0 = arith.constant 0 : i32
    return %arg0, %c0_i32 : i32, i32
  }
  func.func @transform_3(%arg0: i32) -> (i32, i32) {
    %c0_i32 = arith.constant 0 : i32
    %c0_i32_0 = arith.constant 0 : i32
    %c0_i32_1 = arith.constant 0 : i32
    return %c0_i32, %c0_i32_0 : i32, i32
  }
  func.func @transform_4(%arg0: i32) -> (i32, i32) {
    %c0_i32 = arith.constant 0 : i32
    %c0_i32_0 = arith.constant 0 : i32
    %c0_i32_1 = arith.constant 0 : i32
    return %c0_i32, %c0_i32_0 : i32, i32
  }
  func.func @transform_5(%arg0: i32) -> (i32, i32) {
    %c0_i32 = arith.constant 0 : i32
    %c0_i32_0 = arith.constant 0 : i32
    %c0_i32_1 = arith.constant 0 : i32
    return %c0_i32, %c0_i32_0 : i32, i32
  }
  func.func @transform_6(%arg0: i32) -> (i32, i32) {
    %c0_i32 = arith.constant 0 : i32
    %c0_i32_0 = arith.constant 0 : i32
    %c0_i32_1 = arith.constant 0 : i32
    return %c0_i32, %c0_i32_0 : i32, i32
  }
  func.func @transform_7(%arg0: i32) -> (i32, i32) {
    %c0_i32 = arith.constant 0 : i32
    %c0_i32_0 = arith.constant 0 : i32
    %c0_i32_1 = arith.constant 0 : i32
    return %c0_i32, %c0_i32_0 : i32, i32
  }
  func.func @transform_8(%arg0: i32) -> (i32, i32) {
    %c0_i32 = arith.constant 0 : i32
    %c0_i32_0 = arith.constant 0 : i32
    %c0_i32_1 = arith.constant 0 : i32
    return %c0_i32, %c0_i32_0 : i32, i32
  }
  func.func @transform_9(%arg0: i32) -> (i32, i32) {
    %c0_i32 = arith.constant 0 : i32
    %c0_i32_0 = arith.constant 0 : i32
    %c0_i32_1 = arith.constant 0 : i32
    return %c0_i32, %c0_i32_0 : i32, i32
  }
  func.func @transform_10(%arg0: i32) -> (i32, i32) {
    %c0_i32 = arith.constant 0 : i32
    %c0_i32_0 = arith.constant 0 : i32
    %c0_i32_1 = arith.constant 0 : i32
    return %c0_i32, %c0_i32_0 : i32, i32
  }
  func.func @transform_11(%arg0: i32) -> (i32, i32) {
    %c0_i32 = arith.constant 0 : i32
    %c0_i32_0 = arith.constant 0 : i32
    %c0_i32_1 = arith.constant 0 : i32
    return %c0_i32, %c0_i32_0 : i32, i32
  }
  func.func @transform_12(%arg0: i32) -> (i32, i32) {
    %c0_i32 = arith.constant 0 : i32
    %c0_i32_0 = arith.constant 0 : i32
    %c0_i32_1 = arith.constant 0 : i32
    return %c0_i32, %c0_i32_0 : i32, i32
  }
  func.func @transform_13(%arg0: i32) -> (i32, i32) {
    %c0_i32 = arith.constant 0 : i32
    %c0_i32_0 = arith.constant 0 : i32
    %c0_i32_1 = arith.constant 0 : i32
    return %c0_i32, %c0_i32_0 : i32, i32
  }
  func.func @transform_14(%arg0: i32) -> (i32, i32) {
    %c0_i32 = arith.constant 0 : i32
    %c0_i32_0 = arith.constant 0 : i32
    %c0_i32_1 = arith.constant 0 : i32
    return %c0_i32, %c0_i32_0 : i32, i32
  }
  func.func @transform_15(%arg0: i32) -> (i32, i32) {
    %c0_i32 = arith.constant 0 : i32
    %c0_i32_0 = arith.constant 0 : i32
    %c0_i32_1 = arith.constant 0 : i32
    return %c0_i32, %c0_i32_0 : i32, i32
  }
  func.func @transform_16(%arg0: i32) -> (i32, i32) {
    %c0_i32 = arith.constant 0 : i32
    %c0_i32_0 = arith.constant 0 : i32
    %c0_i32_1 = arith.constant 0 : i32
    return %c0_i32, %c0_i32_0 : i32, i32
  }
  func.func @transform_17(%arg0: i32) -> (i32, i32) {
    %c0_i32 = arith.constant 0 : i32
    %c0_i32_0 = arith.constant 0 : i32
    %c0_i32_1 = arith.constant 0 : i32
    return %c0_i32, %c0_i32_0 : i32, i32
  }
  func.func @transform_18(%arg0: i32) -> (i32, i32) {
    %c0_i32 = arith.constant 0 : i32
    %c0_i32_0 = arith.constant 0 : i32
    %c0_i32_1 = arith.constant 0 : i32
    return %c0_i32, %c0_i32_0 : i32, i32
  }
  func.func @transform_19(%arg0: i32) -> (i32, i32) {
    %c0_i32 = arith.constant 0 : i32
    %c0_i32_0 = arith.constant 0 : i32
    %c0_i32_1 = arith.constant 0 : i32
    return %c0_i32, %c0_i32_0 : i32, i32
  }
  func.func @transform_20(%arg0: i32) -> (i32, i32) {
    %c0_i32 = arith.constant 0 : i32
    %c0_i32_0 = arith.constant 0 : i32
    %c0_i32_1 = arith.constant 0 : i32
    return %c0_i32, %c0_i32_0 : i32, i32
  }
  func.func @transform_21(%arg0: i32) -> (i32, i32) {
    %c0_i32 = arith.constant 0 : i32
    %c0_i32_0 = arith.constant 0 : i32
    %c0_i32_1 = arith.constant 0 : i32
    return %c0_i32, %c0_i32_0 : i32, i32
  }
  func.func @transform_22(%arg0: i32) -> (i32, i32) {
    %c0_i32 = arith.constant 0 : i32
    %c0_i32_0 = arith.constant 0 : i32
    %c0_i32_1 = arith.constant 0 : i32
    return %c0_i32, %c0_i32_0 : i32, i32
  }
  func.func @transform_23(%arg0: i32) -> (i32, i32) {
    %c0_i32 = arith.constant 0 : i32
    %c0_i32_0 = arith.constant 0 : i32
    return %arg0, %c0_i32 : i32, i32
  }
  func.func @transform_24(%arg0: i32) -> (i32, i32) {
    %c0_i32 = arith.constant 0 : i32
    %c0_i32_0 = arith.constant 0 : i32
    return %arg0, %c0_i32 : i32, i32
  }
  func.func @transform_25(%arg0: i32) -> (i32, i32) {
    %c0_i32 = arith.constant 0 : i32
    %c0_i32_0 = arith.constant 0 : i32
    return %arg0, %c0_i32 : i32, i32
  }
}

</mosaic_0001>

<llo_original>
// kernel: tpu_custom_call.1
$region0: #{tpu_custom_call.1}
  #allocation0 [shape = 'u32[]', space=smem, size = 0x4, offset = 0x4, fixed_abs, tag = 'smem constant byte address 0x4 - core index']
  #allocation1 [shape = 'u32[72,128]{1,0:T(1,128)}', space=vmem, size = 0x9000, scoped, tag = 'internal scratch']
  %s0 = inlined_call_operand.hbm [shape: f32[8,128], index: 0, kind: input, shape index: {}]
  %s1 = inlined_call_operand.hbm [shape: f32[8,128], index: 1, kind: output, shape index: {}]
  %s2 = sld [smem:[#allocation0]]
  $region41: #{tpu_custom_call.1} parent=0
    _
  %s4 = ssub.s32 1, %s2
  %s5 = scalar_select 0, %s4, %s2
  $region1: #{tpu_custom_call.1} parent=0
    #allocation2 [shape = 'u8[4096]{0}', space=vmem, size = 0x1000, scoped, tag = 'input window, operand 0, single buffered']
    #allocation3 [shape = 's32[2]{0}', space=sflag, size = 0x8, scoped, tag = 'scoped memory for tpu_custom_call.1']
    #allocation4 [shape = 's32[2]{0}', space=sflag, size = 0x8, scoped, tag = 'scoped memory for tpu_custom_call.1']
    #allocation5 [shape = 'u8[4096]{0}', space=vmem, size = 0x1000, scoped, tag = 'output window, operand 0, single buffered']
    %6 = vsyncpa [#allocation3], 0
    %7 = vsyncpa [#allocation4], 0
    loop: start=0, step=1, limit=4
    $region2: #{tpu_custom_call.1} parent=1 // loop_pre_header
      _
    $region3: #{tpu_custom_call.1} parent=1 // loop_header
      %s9 = sphi 0, %s13
      %p10 = scmp.ge.s32.totalorder %s9, 4
      %s17 = sphi 0, %s17
      %s19 = sphi 0, %s17
      %s20 = sphi 0, %s19
      %s34 = sphi 0, %s20
      %s38 = sphi 0, %s38
      %s40 = sphi 0, %s38
      %s41 = sphi 0, %s40
      %s55 = sphi 0, %s41
    $region4: #{tpu_custom_call.1} parent=1 // loop_header_branch
      %12 = sbr.rel (%p10) target = $region8
    $region5: #{tpu_custom_call.1} parent=1 // loop_body
      %s14 = ssub.s32 %s9, 1
      %s15 = ssub.s32 %s9, 2
      %s16 = sadd.s32 %s9, 1
      %s18 = sadd.s32 %s17, 1
      %p21 = scmp.eq.s32.totalorder %s9, 1
      %p22 = scmp.ne.s32.totalorder %s17, %s19
      %p23 = scmp.eq.s32.totalorder %s9, 0
      %p24 = por %p22, %p23
      %p25 = scmp.ne.s32.totalorder %s17, %s19
      %p26 = scmp.eq.s32.totalorder %s14, 1
      %p27 = por %p25, %p26
      %p28 = scmp.ne.s32.totalorder %s19, %s20
      %p29 = scmp.eq.s32.totalorder %s14, 0
      %p30 = por %p28, %p29
      %p31 = scmp.ne.s32.totalorder %s19, %s20
      %p32 = scmp.eq.s32.totalorder %s15, 1
      %p33 = por %p31, %p32
      %p35 = scmp.ne.s32.totalorder %s20, %s34
      %p36 = scmp.eq.s32.totalorder %s15, 0
      %p37 = por %p35, %p36
      %s39 = sadd.s32 %s38, 1
      %p42 = scmp.eq.s32.totalorder %s9, 1
      %p43 = scmp.ne.s32.totalorder %s38, %s40
      %p44 = scmp.eq.s32.totalorder %s9, 0
      %p45 = por %p43, %p44
      %p46 = scmp.ne.s32.totalorder %s38, %s40
      %p47 = scmp.eq.s32.totalorder %s14, 1
      %p48 = por %p46, %p47
      %p49 = scmp.ne.s32.totalorder %s40, %s41
      %p50 = scmp.eq.s32.totalorder %s14, 0
      %p51 = por %p49, %p50
      %p52 = scmp.ne.s32.totalorder %s40, %s41
      %p53 = scmp.eq.s32.totalorder %s15, 1
      %p54 = por %p52, %p53
      %p56 = scmp.ne.s32.totalorder %s41, %s55
      %p57 = scmp.eq.s32.totalorder %s15, 0
      %p58 = por %p56, %p57
      %p59 = scmp.le.s32.totalorder 1, %s9
      %p60 = scmp.lt.s32.totalorder %s9, 3
      %p61 = pnand %p59, %p60
      %p62 = pneg %p61
      // Predicated region
      $region9: #{tpu_custom_call.1} parent=5 // pred_check
        _
      $region10: #{tpu_custom_call.1} parent=5 // pred_check_branch
        %64 = sbr.rel (%p61) target = $region12
      $region11: #{tpu_custom_call.1} parent=5 // pred_region
        %s65 = ssub.s32 %s9, 1
        // Predicated region
        $region13: #{tpu_custom_call.1} parent=11 // pred_check
          %p66 = pneg %p30
        $region14: #{tpu_custom_call.1} parent=11 // pred_check_branch
          %68 = sbr.rel (%p66) target = $region16
        $region15: #{tpu_custom_call.1} parent=11 // pred_region
          %70 = vsyncadd [#allocation3], 0
          %s72 = sshll.u32 %s0, 4
          %s73 = int_to_ptr.hbm [resolvable:$true] %s72
          %s74 = sshll.u32 [#allocation2], 4
          %s75 = int_to_ptr.vmem [resolvable:$true] %s74
          %77 = dma.hbm_to_vmem [thread:$0]  %s73, 128, %s75, [#allocation3]
        $region16: #{tpu_custom_call.1} parent=11 // pred_fallthru
          _
      $region12: #{tpu_custom_call.1} parent=5 // pred_fallthru
        _
      %p78 = scmp.lt.s32.totalorder %s9, 2
      // Predicated region
      $region17: #{tpu_custom_call.1} parent=5 // pred_check
        %p79 = pneg %p78
      $region18: #{tpu_custom_call.1} parent=5 // pred_check_branch
        %81 = sbr.rel (%p79) target = $region20
      $region19: #{tpu_custom_call.1} parent=5 // pred_region
        _
      $region20: #{tpu_custom_call.1} parent=5 // pred_fallthru
        _
      %p82 = scmp.le.s32.totalorder 1, %s9
      %p83 = scmp.lt.s32.totalorder %s9, 3
      %p84 = pnand %p82, %p83
      %p85 = pneg %p84
      // Predicated region
      $region21: #{tpu_custom_call.1} parent=5 // pred_check
        _
      $region22: #{tpu_custom_call.1} parent=5 // pred_check_branch
        %87 = sbr.rel (%p84) target = $region24
      $region23: #{tpu_custom_call.1} parent=5 // pred_region
        %s88 = ssub.s32 %s9, 1
        // Predicated region
        $region25: #{tpu_custom_call.1} parent=23 // pred_check
          %p89 = pneg %p30
        $region26: #{tpu_custom_call.1} parent=23 // pred_check_branch
          %91 = sbr.rel (%p89) target = $region28
        $region27: #{tpu_custom_call.1} parent=23 // pred_region
          %93 = dma.done [#allocation3], 128
        $region28: #{tpu_custom_call.1} parent=23 // pred_fallthru
          _
        %p94 = pneg %p30
        %p95 = pneg %p27
        %p96 = pneg %p51
        %p97 = pneg %p48
        %v98 = vld [vmem:[#allocation2] sm:$0xff]
        %v99 = vadd.f32 %v98, 1.0
        %100 = vst [vmem:[#allocation5] sm:$0xff] %v99
        // Predicated region
        $region29: #{tpu_custom_call.1} parent=23 // pred_check
          %p101 = pneg %p48
        $region30: #{tpu_custom_call.1} parent=23 // pred_check_branch
          %103 = sbr.rel (%p101) target = $region32
        $region31: #{tpu_custom_call.1} parent=23 // pred_region
          %105 = vsyncadd [#allocation4], 0
          %s107 = sshll.u32 [#allocation5], 4
          %s108 = int_to_ptr.vmem [resolvable:$true] %s107
          %s109 = sshll.u32 %s1, 4
          %s110 = int_to_ptr.hbm [resolvable:$true] %s109
          %112 = dma.vmem_to_hbm [thread:$0]  %s108, 128, %s110, [#allocation4]
        $region32: #{tpu_custom_call.1} parent=23 // pred_fallthru
          _
        // Predicated region
        $region33: #{tpu_custom_call.1} parent=23 // pred_check
          %p113 = pneg %p48
        $region34: #{tpu_custom_call.1} parent=23 // pred_check_branch
          %115 = sbr.rel (%p113) target = $region36
        $region35: #{tpu_custom_call.1} parent=23 // pred_region
          %117 = dma.done [#allocation4], 128
        $region36: #{tpu_custom_call.1} parent=23 // pred_fallthru
          _
      $region24: #{tpu_custom_call.1} parent=5 // pred_fallthru
        _
      %p118 = scmp.le.s32.totalorder 2, %s9
      // Predicated region
      $region37: #{tpu_custom_call.1} parent=5 // pred_check
        %p119 = pneg %p118
      $region38: #{tpu_custom_call.1} parent=5 // pred_check_branch
        %121 = sbr.rel (%p119) target = $region40
      $region39: #{tpu_custom_call.1} parent=5 // pred_region
        %s122 = ssub.s32 %s9, 2
      $region40: #{tpu_custom_call.1} parent=5 // pred_fallthru
        _
    $region6: #{tpu_custom_call.1} parent=1 // loop_footer
      %s13 = sadd.s32 1, %s9
    $region7: #{tpu_custom_call.1} parent=1 // loop_footer_branch
      %8 = sbr.rel target = $region3
    $region8: #{tpu_custom_call.1} parent=1 // loop_exit
      _
    %123 = vsyncpa [#allocation3], 1
    %s124 = scalar_lea.sflag [#allocation3], 1
    %125 = vsyncpa %s124, 1
    %126 = vsyncpa [#allocation4], 1
    %s127 = scalar_lea.sflag [#allocation4], 1
    %128 = vsyncpa %s127, 1

// kernel: tpu_custom_call.1
$region0: #{tpu_custom_call.1}
  #allocation0 [shape = 'u32[]', space=smem, size = 0x4, offset = 0x4, fixed_abs, tag = 'smem constant byte address 0x4 - core index']
  #allocation1 [shape = 'u32[72,128]{1,0:T(1,128)}', space=vmem, size = 0x9000, scoped, tag = 'internal scratch']
  %s0 = inlined_call_operand.hbm [shape: f32[8,32], index: 0, kind: input, shape index: {}]
  %s1 = inlined_call_operand.hbm [shape: f32[8,128], index: 1, kind: input, shape index: {}]
  %s2 = inlined_call_operand.hbm [shape: f32[8,128], index: 2, kind: input, shape index: {}]
  %s3 = inlined_call_operand.vmem [shape: f32[32,32], index: 3, kind: input, shape index: {}]
  %s4 = inlined_call_operand.vmem [shape: f32[1,32], index: 4, kind: input, shape index: {}]
  %s5 = inlined_call_operand.vmem [shape: f32[32,32], index: 5, kind: input, shape index: {}]
  %s6 = inlined_call_operand.hbm [shape: f32[1,32], index: 6, kind: input, shape index: {}]
  %s7 = inlined_call_operand.vmem [shape: f32[32,256], index: 7, kind: input, shape index: {}]
  %s8 = inlined_call_operand.vmem [shape: f32[1,256], index: 8, kind: input, shape index: {}]
  %s9 = inlined_call_operand.vmem [shape: f32[128,32], index: 9, kind: input, shape index: {}]
  %s10 = inlined_call_operand.vmem [shape: f32[1,32], index: 10, kind: input, shape index: {}]
  %s11 = inlined_call_operand.vmem [shape: f32[32,32], index: 11, kind: input, shape index: {}]
  %s12 = inlined_call_operand.vmem [shape: f32[1,32], index: 12, kind: input, shape index: {}]
  %s13 = inlined_call_operand.vmem [shape: f32[32,256], index: 13, kind: input, shape index: {}]
  %s14 = inlined_call_operand.vmem [shape: f32[1,256], index: 14, kind: input, shape index: {}]
  %s15 = inlined_call_operand.vmem [shape: f32[128,32], index: 15, kind: input, shape index: {}]
  %s16 = inlined_call_operand.vmem [shape: f32[1,32], index: 16, kind: input, shape index: {}]
  %s17 = inlined_call_operand.vmem [shape: f32[32,32], index: 17, kind: input, shape index: {}]
  %s18 = inlined_call_operand.vmem [shape: f32[1,32], index: 18, kind: input, shape index: {}]
  %s19 = inlined_call_operand.vmem [shape: f32[32,128], index: 19, kind: input, shape index: {}]
  %s20 = inlined_call_operand.vmem [shape: f32[1,128], index: 20, kind: input, shape index: {}]
  %s21 = inlined_call_operand.vmem [shape: f32[1,128], index: 21, kind: input, shape index: {}]
  %s22 = inlined_call_operand.vmem [shape: f32[1,128], index: 22, kind: input, shape index: {}]
  %s23 = inlined_call_operand.hbm [shape: f32[8,768], index: 23, kind: output, shape index: {0}]
  %s24 = inlined_call_operand.hbm [shape: f32[8,128], index: 24, kind: output, shape index: {1}]
  %s25 = inlined_call_operand.hbm [shape: f32[8,128], index: 25, kind: output, shape index: {2}]
  %26 = xla_tuple %s23, %s24, %s25
  %s27 = sld [smem:[#allocation0]]
  $region134: #{tpu_custom_call.1} parent=0
    _
  %s29 = ssub.s32 1, %s27
  %s30 = scalar_select 0, %s29, %s27
  $region1: #{tpu_custom_call.1} parent=0
    #allocation2 [shape = 'u8[4096]{0}', space=vmem, size = 0x1000, scoped, tag = 'input window, operand 0, single buffered']
    #allocation3 [shape = 's32[1]{0}', space=sflag, size = 0x4, scoped, tag = 'scoped memory for tpu_custom_call.1']
    #allocation4 [shape = 's32[1]{0}', space=sflag, size = 0x4, scoped, tag = 'scoped memory for tpu_custom_call.1']
    #allocation5 [shape = 'u8[4096]{0}', space=vmem, size = 0x1000, scoped, tag = 'input window, operand 1, single buffered']
    #allocation6 [shape = 's32[1]{0}', space=sflag, size = 0x4, scoped, tag = 'scoped memory for tpu_custom_call.1']
    #allocation7 [shape = 'u8[4096]{0}', space=vmem, size = 0x1000, scoped, tag = 'input window, operand 2, single buffered']
    #allocation8 [shape = 'u8[512]{0}', space=vmem, size = 0x400, scoped, tag = 'input window, operand 6, single buffered']
    #allocation9 [shape = 's32[1]{0}', space=sflag, size = 0x4, scoped, tag = 'scoped memory for tpu_custom_call.1']
    #allocation10 [shape = 'u8[24576]{0}', space=vmem, size = 0x6000, scoped, tag = 'output window, operand 0, single buffered']
    #allocation11 [shape = 'u8[4096]{0}', space=vmem, size = 0x1000, scoped, tag = 'output window, operand 1, single buffered']
    #allocation12 [shape = 's32[1]{0}', space=sflag, size = 0x4, scoped, tag = 'scoped memory for tpu_custom_call.1']
    #allocation13 [shape = 'u8[4096]{0}', space=vmem, size = 0x1000, scoped, tag = 'output window, operand 2, single buffered']
    %31 = vsyncpa [#allocation3], 0
    %32 = vsyncpa [#allocation6], 0
    %33 = vsyncpa [#allocation9], 0
    %34 = vsyncpa [#allocation4], 0
    %35 = vsyncpa [#allocation12], 0
    // Predicated region
    $region2: #{tpu_custom_call.1} parent=1 // pred_check
      _
    $region3: #{tpu_custom_call.1} parent=1 // pred_check_branch
      %37 = sbr.rel (0) target = $region5
    $region4: #{tpu_custom_call.1} parent=1 // pred_region
      %39 = vsyncadd [#allocation3], 0
      %s41 = sshll.u32 %s0, 4
      %s42 = int_to_ptr.hbm [resolvable:$true] %s41
      %s43 = sshll.u32 [#allocation2], 4
      %s44 = int_to_ptr.vmem [resolvable:$true] %s43
      %46 = dma.hbm_to_vmem [thread:$0]  %s42, 128, %s44, [#allocation3]
    $region5: #{tpu_custom_call.1} parent=1 // pred_fallthru
      _
    // Predicated region
    $region6: #{tpu_custom_call.1} parent=1 // pred_check
      _
    $region7: #{tpu_custom_call.1} parent=1 // pred_check_branch
      %48 = sbr.rel (0) target = $region9
    $region8: #{tpu_custom_call.1} parent=1 // pred_region
      %50 = vsyncadd [#allocation6], 0
      %s52 = sshll.u32 %s1, 4
      %s53 = int_to_ptr.hbm [resolvable:$true] %s52
      %s54 = sshll.u32 [#allocation5], 4
      %s55 = int_to_ptr.vmem [resolvable:$true] %s54
      %57 = dma.hbm_to_vmem [thread:$0]  %s53, 128, %s55, [#allocation6]
    $region9: #{tpu_custom_call.1} parent=1 // pred_fallthru
      _
    // Predicated region
    $region10: #{tpu_custom_call.1} parent=1 // pred_check
      _
    $region11: #{tpu_custom_call.1} parent=1 // pred_check_branch
      %59 = sbr.rel (0) target = $region13
    $region12: #{tpu_custom_call.1} parent=1 // pred_region
      %61 = vsyncadd [#allocation6], 0
      %s63 = sshll.u32 %s2, 4
      %s64 = int_to_ptr.hbm [resolvable:$true] %s63
      %s65 = sshll.u32 [#allocation7], 4
      %s66 = int_to_ptr.vmem [resolvable:$true] %s65
      %68 = dma.hbm_to_vmem [thread:$0]  %s64, 128, %s66, [#allocation6]
    $region13: #{tpu_custom_call.1} parent=1 // pred_fallthru
      _
    // Predicated region
    $region14: #{tpu_custom_call.1} parent=1 // pred_check
      _
    $region15: #{tpu_custom_call.1} parent=1 // pred_check_branch
      %70 = sbr.rel (0) target = $region17
    $region16: #{tpu_custom_call.1} parent=1 // pred_region
      _
    $region17: #{tpu_custom_call.1} parent=1 // pred_fallthru
      _
    // Predicated region
    $region18: #{tpu_custom_call.1} parent=1 // pred_check
      _
    $region19: #{tpu_custom_call.1} parent=1 // pred_check_branch
      %72 = sbr.rel (0) target = $region21
    $region20: #{tpu_custom_call.1} parent=1 // pred_region
      _
    $region21: #{tpu_custom_call.1} parent=1 // pred_fallthru
      _
    // Predicated region
    $region22: #{tpu_custom_call.1} parent=1 // pred_check
      _
    $region23: #{tpu_custom_call.1} parent=1 // pred_check_branch
      %74 = sbr.rel (0) target = $region25
    $region24: #{tpu_custom_call.1} parent=1 // pred_region
      _
    $region25: #{tpu_custom_call.1} parent=1 // pred_fallthru
      _
    // Predicated region
    $region26: #{tpu_custom_call.1} parent=1 // pred_check
      _
    $region27: #{tpu_custom_call.1} parent=1 // pred_check_branch
      %76 = sbr.rel (0) target = $region29
    $region28: #{tpu_custom_call.1} parent=1 // pred_region
      %78 = vsyncadd [#allocation9], 0
      %s80 = sshll.u32 %s6, 4
      %s81 = int_to_ptr.hbm [resolvable:$true] %s80
      %s82 = sshll.u32 [#allocation8], 4
      %s83 = int_to_ptr.vmem [resolvable:$true] %s82
      %85 = dma.hbm_to_vmem [thread:$0]  %s81, 16, %s83, [#allocation9]
    $region29: #{tpu_custom_call.1} parent=1 // pred_fallthru
      _
    // Predicated region
    $region30: #{tpu_custom_call.1} parent=1 // pred_check
      _
    $region31: #{tpu_custom_call.1} parent=1 // pred_check_branch
      %87 = sbr.rel (0) target = $region33
    $region32: #{tpu_custom_call.1} parent=1 // pred_region
      _
    $region33: #{tpu_custom_call.1} parent=1 // pred_fallthru
      _
    // Predicated region
    $region34: #{tpu_custom_call.1} parent=1 // pred_check
      _
    $region35: #{tpu_custom_call.1} parent=1 // pred_check_branch
      %89 = sbr.rel (0) target = $region37
    $region36: #{tpu_custom_call.1} parent=1 // pred_region
      _
    $region37: #{tpu_custom_call.1} parent=1 // pred_fallthru
      _
    // Predicated region
    $region38: #{tpu_custom_call.1} parent=1 // pred_check
      _
    $region39: #{tpu_custom_call.1} parent=1 // pred_check_branch
      %91 = sbr.rel (0) target = $region41
    $region40: #{tpu_custom_call.1} parent=1 // pred_region
      _
    $region41: #{tpu_custom_call.1} parent=1 // pred_fallthru
      _
    // Predicated region
    $region42: #{tpu_custom_call.1} parent=1 // pred_check
      _
    $region43: #{tpu_custom_call.1} parent=1 // pred_check_branch
      %93 = sbr.rel (0) target = $region45
    $region44: #{tpu_custom_call.1} parent=1 // pred_region
      _
    $region45: #{tpu_custom_call.1} parent=1 // pred_fallthru
      _
    // Predicated region
    $region46: #{tpu_custom_call.1} parent=1 // pred_check
      _
    $region47: #{tpu_custom_call.1} parent=1 // pred_check_branch
      %95 = sbr.rel (0) target = $region49
    $region48: #{tpu_custom_call.1} parent=1 // pred_region
      _
    $region49: #{tpu_custom_call.1} parent=1 // pred_fallthru
      _
    // Predicated region
    $region50: #{tpu_custom_call.1} parent=1 // pred_check
      _
    $region51: #{tpu_custom_call.1} parent=1 // pred_check_branch
      %97 = sbr.rel (0) target = $region53
    $region52: #{tpu_custom_call.1} parent=1 // pred_region
      _
    $region53: #{tpu_custom_call.1} parent=1 // pred_fallthru
      _
    // Predicated region
    $region54: #{tpu_custom_call.1} parent=1 // pred_check
      _
    $region55: #{tpu_custom_call.1} parent=1 // pred_check_branch
      %99 = sbr.rel (0) target = $region57
    $region56: #{tpu_custom_call.1} parent=1 // pred_region
      _
    $region57: #{tpu_custom_call.1} parent=1 // pred_fallthru
      _
    // Predicated region
    $region58: #{tpu_custom_call.1} parent=1 // pred_check
      _
    $region59: #{tpu_custom_call.1} parent=1 // pred_check_branch
      %101 = sbr.rel (0) target = $region61
    $region60: #{tpu_custom_call.1} parent=1 // pred_region
      _
    $region61: #{tpu_custom_call.1} parent=1 // pred_fallthru
      _
    // Predicated region
    $region62: #{tpu_custom_call.1} parent=1 // pred_check
      _
    $region63: #{tpu_custom_call.1} parent=1 // pred_check_branch
      %103 = sbr.rel (0) target = $region65
    $region64: #{tpu_custom_call.1} parent=1 // pred_region
      _
    $region65: #{tpu_custom_call.1} parent=1 // pred_fallthru
      _
    // Predicated region
    $region66: #{tpu_custom_call.1} parent=1 // pred_check
      _
    $region67: #{tpu_custom_call.1} parent=1 // pred_check_branch
      %105 = sbr.rel (0) target = $region69
    $region68: #{tpu_custom_call.1} parent=1 // pred_region
      _
    $region69: #{tpu_custom_call.1} parent=1 // pred_fallthru
      _
    // Predicated region
    $region70: #{tpu_custom_call.1} parent=1 // pred_check
      _
    $region71: #{tpu_custom_call.1} parent=1 // pred_check_branch
      %107 = sbr.rel (0) target = $region73
    $region72: #{tpu_custom_call.1} parent=1 // pred_region
      _
    $region73: #{tpu_custom_call.1} parent=1 // pred_fallthru
      _
    // Predicated region
    $region74: #{tpu_custom_call.1} parent=1 // pred_check
      _
    $region75: #{tpu_custom_call.1} parent=1 // pred_check_branch
      %109 = sbr.rel (0) target = $region77
    $region76: #{tpu_custom_call.1} parent=1 // pred_region
      _
    $region77: #{tpu_custom_call.1} parent=1 // pred_fallthru
      _
    // Predicated region
    $region78: #{tpu_custom_call.1} parent=1 // pred_check
      _
    $region79: #{tpu_custom_call.1} parent=1 // pred_check_branch
      %111 = sbr.rel (0) target = $region81
    $region80: #{tpu_custom_call.1} parent=1 // pred_region
      _
    $region81: #{tpu_custom_call.1} parent=1 // pred_fallthru
      _
    // Predicated region
    $region82: #{tpu_custom_call.1} parent=1 // pred_check
      _
    $region83: #{tpu_custom_call.1} parent=1 // pred_check_branch
      %113 = sbr.rel (0) target = $region85
    $region84: #{tpu_custom_call.1} parent=1 // pred_region
      _
    $region85: #{tpu_custom_call.1} parent=1 // pred_fallthru
      _
    // Predicated region
    $region86: #{tpu_custom_call.1} parent=1 // pred_check
      _
    $region87: #{tpu_custom_call.1} parent=1 // pred_check_branch
      %115 = sbr.rel (0) target = $region89
    $region88: #{tpu_custom_call.1} parent=1 // pred_region
      _
    $region89: #{tpu_custom_call.1} parent=1 // pred_fallthru
      _
    // Predicated region
    $region90: #{tpu_custom_call.1} parent=1 // pred_check
      _
    $region91: #{tpu_custom_call.1} parent=1 // pred_check_branch
      %117 = sbr.rel (0) target = $region93
    $region92: #{tpu_custom_call.1} parent=1 // pred_region
      _
    $region93: #{tpu_custom_call.1} parent=1 // pred_fallthru
      _
    // Predicated region
    $region94: #{tpu_custom_call.1} parent=1 // pred_check
      _
    $region95: #{tpu_custom_call.1} parent=1 // pred_check_branch
      %119 = sbr.rel (0) target = $region97
    $region96: #{tpu_custom_call.1} parent=1 // pred_region
      %121 = dma.done [#allocation3], 128
    $region97: #{tpu_custom_call.1} parent=1 // pred_fallthru
      _
    // Predicated region
    $region98: #{tpu_custom_call.1} parent=1 // pred_check
      _
    $region99: #{tpu_custom_call.1} parent=1 // pred_check_branch
      %123 = sbr.rel (0) target = $region101
    $region100: #{tpu_custom_call.1} parent=1 // pred_region
      %125 = dma.done [#allocation6], 128
    $region101: #{tpu_custom_call.1} parent=1 // pred_fallthru
      _
    // Predicated region
    $region102: #{tpu_custom_call.1} parent=1 // pred_check
      _
    $region103: #{tpu_custom_call.1} parent=1 // pred_check_branch
      %127 = sbr.rel (0) target = $region105
    $region104: #{tpu_custom_call.1} parent=1 // pred_region
      %129 = dma.done [#allocation6], 128
    $region105: #{tpu_custom_call.1} parent=1 // pred_fallthru
      _
    // Predicated region
    $region106: #{tpu_custom_call.1} parent=1 // pred_check
      _
    $region107: #{tpu_custom_call.1} parent=1 // pred_check_branch
      %131 = sbr.rel (0) target = $region109
    $region108: #{tpu_custom_call.1} parent=1 // pred_region
      %133 = dma.done [#allocation9], 16
    $region109: #{tpu_custom_call.1} parent=1 // pred_fallthru
      _
    %v134 = vld [vmem:[#allocation2] sm:$0xff]
    %v135 = vld [vmem:[%s3] sm:$0xff]
    %v136 = vld [vmem:[%s3 + $0x8] sm:$0xff]
    %v137 = vld [vmem:[%s3 + $0x10] sm:$0xff]
    %v138 = vld [vmem:[%s3 + $0x18] sm:$0xff]
    %v139 = vld [vmem:[%s4] sm:$0x1]
    %v141 = vperm.slane %v139, 0
    %vm143 = vcmask 261120
    %v145 = vsel %vm143, %v134, 0
    %147 = vmatpush.msra.mxu0 0.0
    %148 = vmatpush.msra.mxu0 0.0
    %149 = vmatpush.msra.mxu0 0.0
    %150 = vmatpush.msra.mxu0 0.0
    %151 = vmatpush.msra.mxu0 0.0
    %152 = vmatpush.msra.mxu0 0.0
    %153 = vmatpush.msra.mxu0 0.0
    %154 = vmatpush.msra.mxu0 0.0
    %155 = vmatpush.msra.mxu0 0.0
    %156 = vmatpush.msra.mxu0 0.0
    %157 = vmatpush.msra.mxu0 0.0
    %158 = vmatpush.msra.mxu0 0.0
    %159 = vmatpush.msra.mxu0 %v138
    %160 = vmatpush.msra.mxu0 %v137
    %161 = vmatpush.msra.mxu0 %v136
    %162 = vmatpush.msra.mxu0 %v135
    %163 = vmatmul.f32.gmra.mxu0 %v145
    %v164 = vpop.f32.mrf.mxu0
    %v165 = vadd.f32 %v141, %v164
    %166 = vdwg.mxu0
    %v167 = vsel %vm143, %v165, 0.0
    %168 = vadd.xlane.f32.xlu0 %v167
    %v169 = vpop.xlane.xlu0 %168
    %v170 = vrcp.pop 32.0
    %v171 = vmul.f32 32.0, %v170
    %v172 = vsub.f32 1.0, %v171
    %v173 = vmul.f32 %v170, %v172
    %v174 = vadd.f32 %v170, %v173
    %vm175 = vweird.f32 %v170
    %v176 = vsel %vm175, %v170, %v174
    %v177 = vmul.f32 %v169, %v176
    %v178 = vsub.f32 %v165, %v177
    %v179 = vmul.f32 %v178, %v178
    %v180 = vsel %vm143, %v179, 0.0
    %181 = vadd.xlane.f32.xlu0 %v180
    %v182 = vpop.xlane.xlu0 %181
    %v183 = vmul.f32 %v182, %v176
    %v184 = vadd.f32 %v183, 1e-05
    %v185 = vrsqrt.pop %v184
    %v186 = vmul.f32 %v185, %v184
    %v187 = vmul.f32 %v186, %v185
    %v188 = vmul.f32 0.5, %v187
    %v189 = vsub.f32 1.5, %v188
    %v190 = vmul.f32 %v185, %v189
    %vm191 = vweird.f32 %v184
    %vm192 = vweird.f32 %v185
    %vm193 = vmor %vm191, %vm192
    %v194 = vsel %vm193, %v185, %v190
    %v195 = vmul.f32 %v178, %v194
    %v196 = vmax.f32 %v195, 0.0
    %v197 = vld [vmem:[%s5] sm:$0xff]
    %v198 = vld [vmem:[%s5 + $0x8] sm:$0xff]
    %v199 = vld [vmem:[%s5 + $0x10] sm:$0xff]
    %v200 = vld [vmem:[%s5 + $0x18] sm:$0xff]
    %v201 = vld [vmem:[#allocation8] sm:$0x1]
    %v203 = vperm.slane %v201, 0
    %v206 = vsel %vm143, %v196, 0
    %208 = vmatpush.msra.mxu0 0.0
    %209 = vmatpush.msra.mxu0 0.0
    %210 = vmatpush.msra.mxu0 0.0
    %211 = vmatpush.msra.mxu0 0.0
    %212 = vmatpush.msra.mxu0 0.0
    %213 = vmatpush.msra.mxu0 0.0
    %214 = vmatpush.msra.mxu0 0.0
    %215 = vmatpush.msra.mxu0 0.0
    %216 = vmatpush.msra.mxu0 0.0
    %217 = vmatpush.msra.mxu0 0.0
    %218 = vmatpush.msra.mxu0 0.0
    %219 = vmatpush.msra.mxu0 0.0
    %220 = vmatpush.msra.mxu0 %v200
    %221 = vmatpush.msra.mxu0 %v199
    %222 = vmatpush.msra.mxu0 %v198
    %223 = vmatpush.msra.mxu0 %v197
    %224 = vmatmul.f32.gmra.mxu0 %v206
    %v225 = vpop.f32.mrf.mxu0
    %v226 = vadd.f32 %v203, %v225
    %227 = vdwg.mxu0
    %v228 = vsel %vm143, %v226, 0.0
    %229 = vadd.xlane.f32.xlu0 %v228
    %v230 = vpop.xlane.xlu0 %229
    %v231 = vmul.f32 %v230, %v176
    %v232 = vsub.f32 %v226, %v231
    %v233 = vmul.f32 %v232, %v232
    %v234 = vsel %vm143, %v233, 0.0
    %235 = vadd.xlane.f32.xlu0 %v234
    %v236 = vpop.xlane.xlu0 %235
    %v237 = vmul.f32 %v236, %v176
    %v238 = vadd.f32 %v237, 1e-05
    %v239 = vrsqrt.pop %v238
    %v240 = vmul.f32 %v239, %v238
    %v241 = vmul.f32 %v240, %v239
    %v242 = vmul.f32 0.5, %v241
    %v243 = vsub.f32 1.5, %v242
    %v244 = vmul.f32 %v239, %v243
    %vm245 = vweird.f32 %v238
    %vm246 = vweird.f32 %v239
    %vm247 = vmor %vm245, %vm246
    %v248 = vsel %vm247, %v239, %v244
    %v249 = vmul.f32 %v232, %v248
    %v250 = vmax.f32 %v249, 0.0
    %v251 = vld [vmem:[%s7] sm:$0xff]
    %v252 = vld [vmem:[%s7 + $0x8] sm:$0xff]
    %v253 = vld [vmem:[%s7 + $0x10] sm:$0xff]
    %v254 = vld [vmem:[%s7 + $0x18] sm:$0xff]
    %v255 = vld [vmem:[%s7 + $0x20] sm:$0xff]
    %v256 = vld [vmem:[%s7 + $0x28] sm:$0xff]
    %v257 = vld [vmem:[%s7 + $0x30] sm:$0xff]
    %v258 = vld [vmem:[%s7 + $0x38] sm:$0xff]
    %v259 = vld [vmem:[%s8] sm:$0x3]
    %v261 = vperm.slane %v259, 0
    %v262 = vperm.slane %v259, 1
    %v266 = vsel %vm143, %v250, 0
    %268 = vmatpush.msra.mxu0 0.0
    %269 = vmatpush.msra.mxu0 0.0
    %270 = vmatpush.msra.mxu0 0.0
    %271 = vmatpush.msra.mxu0 0.0
    %272 = vmatpush.msra.mxu0 0.0
    %273 = vmatpush.msra.mxu0 0.0
    %274 = vmatpush.msra.mxu0 0.0
    %275 = vmatpush.msra.mxu0 0.0
    %276 = vmatpush.msra.mxu0 0.0
    %277 = vmatpush.msra.mxu0 0.0
    %278 = vmatpush.msra.mxu0 0.0
    %279 = vmatpush.msra.mxu0 0.0
    %280 = vmatpush.msra.mxu0 %v257
    %281 = vmatpush.msra.mxu0 %v255
    %282 = vmatpush.msra.mxu0 %v253
    %283 = vmatpush.msra.mxu0 %v251
    %284 = vmatmul.f32.gmra.mxu0 %v266
    %v285 = vpop.f32.mrf.mxu0
    %v286 = vadd.f32 %v261, %v285
    %287 = vdwg.mxu0
    %288 = vmatpush.msra.mxu0 0.0
    %289 = vmatpush.msra.mxu0 0.0
    %290 = vmatpush.msra.mxu0 0.0
    %291 = vmatpush.msra.mxu0 0.0
    %292 = vmatpush.msra.mxu0 0.0
    %293 = vmatpush.msra.mxu0 0.0
    %294 = vmatpush.msra.mxu0 0.0
    %295 = vmatpush.msra.mxu0 0.0
    %296 = vmatpush.msra.mxu0 0.0
    %297 = vmatpush.msra.mxu0 0.0
    %298 = vmatpush.msra.mxu0 0.0
    %299 = vmatpush.msra.mxu0 0.0
    %300 = vmatpush.msra.mxu0 %v258
    %301 = vmatpush.msra.mxu0 %v256
    %302 = vmatpush.msra.mxu0 %v254
    %303 = vmatpush.msra.mxu0 %v252
    %304 = vmatmul.f32.gmra.mxu0 %v266
    %v305 = vpop.f32.mrf.mxu0
    %v306 = vadd.f32 %v262, %v305
    %307 = vdwg.mxu0
    %v308 = vmax.f32 %v306, 0.0
    %v309 = vand.u32 2147483647, %v306
    %v310 = vsub.f32 0.0, %v309
    %v311 = vmul.f32 %v310, 1.442695
    %v312 = vpow.pop %v311
    %v313 = vadd.f32 %v312, 1.0
    %v314 = vlog2.pop %v313
    %v315 = vmul.f32 %v314, 0.6931472
    %v316 = vmul.f32 -0.5, %v312
    %v317 = vadd.f32 %v316, 1.0
    %v318 = vmul.f32 %v317, %v312
    %v319 = vand.u32 2147483647, %v312
    %vm320 = vcmp.lt.f32.partialorder %v319, 0.0004427343
    %v321 = vsel %vm320, %v318, %v315
    %v322 = vadd.f32 %v308, %v321
    %v323 = vld [vmem:[#allocation5] sm:$0xff]
    %v324 = vmul.f32 %v322, %v323
    %v325 = vadd.f32 %v286, %v324
    %v326 = vld [vmem:[%s9] sm:$0xff]
    %v327 = vld [vmem:[%s9 + $0x8] sm:$0xff]
    %v328 = vld [vmem:[%s9 + $0x10] sm:$0xff]
    %v329 = vld [vmem:[%s9 + $0x18] sm:$0xff]
    %v330 = vld [vmem:[%s9 + $0x20] sm:$0xff]
    %v331 = vld [vmem:[%s9 + $0x28] sm:$0xff]
    %v332 = vld [vmem:[%s9 + $0x30] sm:$0xff]
    %v333 = vld [vmem:[%s9 + $0x38] sm:$0xff]
    %v334 = vld [vmem:[%s9 + $0x40] sm:$0xff]
    %v335 = vld [vmem:[%s9 + $0x48] sm:$0xff]
    %v336 = vld [vmem:[%s9 + $0x50] sm:$0xff]
    %v337 = vld [vmem:[%s9 + $0x58] sm:$0xff]
    %v338 = vld [vmem:[%s9 + $0x60] sm:$0xff]
    %v339 = vld [vmem:[%s9 + $0x68] sm:$0xff]
    %v340 = vld [vmem:[%s9 + $0x70] sm:$0xff]
    %v341 = vld [vmem:[%s9 + $0x78] sm:$0xff]
    %v342 = vld [vmem:[%s10] sm:$0x1]
    %v344 = vperm.slane %v342, 0
    %346 = vmatpush.msra.mxu0 %v341
    %347 = vmatpush.msra.mxu0 %v340
    %348 = vmatpush.msra.mxu0 %v339
    %349 = vmatpush.msra.mxu0 %v338
    %350 = vmatpush.msra.mxu0 %v337
    %351 = vmatpush.msra.mxu0 %v336
    %352 = vmatpush.msra.mxu0 %v335
    %353 = vmatpush.msra.mxu0 %v334
    %354 = vmatpush.msra.mxu0 %v333
    %355 = vmatpush.msra.mxu0 %v332
    %356 = vmatpush.msra.mxu0 %v331
    %357 = vmatpush.msra.mxu0 %v330
    %358 = vmatpush.msra.mxu0 %v329
    %359 = vmatpush.msra.mxu0 %v328
    %360 = vmatpush.msra.mxu0 %v327
    %361 = vmatpush.msra.mxu0 %v326
    %362 = vmatmul.f32.gmra.mxu0 %v325
    %v363 = vpop.f32.mrf.mxu0
    %v364 = vadd.f32 %v344, %v363
    %365 = vdwg.mxu0
    %v366 = vsel %vm143, %v364, 0.0
    %367 = vadd.xlane.f32.xlu0 %v366
    %v368 = vpop.xlane.xlu0 %367
    %v369 = vmul.f32 %v368, %v176
    %v370 = vsub.f32 %v364, %v369
    %v371 = vmul.f32 %v370, %v370
    %v372 = vsel %vm143, %v371, 0.0
    %373 = vadd.xlane.f32.xlu0 %v372
    %v374 = vpop.xlane.xlu0 %373
    %v375 = vmul.f32 %v374, %v176
    %v376 = vadd.f32 %v375, 1e-05
    %v377 = vrsqrt.pop %v376
    %v378 = vmul.f32 %v377, %v376
    %v379 = vmul.f32 %v378, %v377
    %v380 = vmul.f32 0.5, %v379
    %v381 = vsub.f32 1.5, %v380
    %v382 = vmul.f32 %v377, %v381
    %vm383 = vweird.f32 %v376
    %vm384 = vweird.f32 %v377
    %vm385 = vmor %vm383, %vm384
    %v386 = vsel %vm385, %v377, %v382
    %v387 = vmul.f32 %v370, %v386
    %v388 = vmax.f32 %v387, 0.0
    %v389 = vld [vmem:[%s11] sm:$0xff]
    %v390 = vld [vmem:[%s11 + $0x8] sm:$0xff]
    %v391 = vld [vmem:[%s11 + $0x10] sm:$0xff]
    %v392 = vld [vmem:[%s11 + $0x18] sm:$0xff]
    %v393 = vld [vmem:[%s12] sm:$0x1]
    %v395 = vperm.slane %v393, 0
    %v398 = vsel %vm143, %v388, 0
    %400 = vmatpush.msra.mxu0 0.0
    %401 = vmatpush.msra.mxu0 0.0
    %402 = vmatpush.msra.mxu0 0.0
    %403 = vmatpush.msra.mxu0 0.0
    %404 = vmatpush.msra.mxu0 0.0
    %405 = vmatpush.msra.mxu0 0.0
    %406 = vmatpush.msra.mxu0 0.0
    %407 = vmatpush.msra.mxu0 0.0
    %408 = vmatpush.msra.mxu0 0.0
    %409 = vmatpush.msra.mxu0 0.0
    %410 = vmatpush.msra.mxu0 0.0
    %411 = vmatpush.msra.mxu0 0.0
    %412 = vmatpush.msra.mxu0 %v392
    %413 = vmatpush.msra.mxu0 %v391
    %414 = vmatpush.msra.mxu0 %v390
    %415 = vmatpush.msra.mxu0 %v389
    %416 = vmatmul.f32.gmra.mxu0 %v398
    %v417 = vpop.f32.mrf.mxu0
    %v418 = vadd.f32 %v395, %v417
    %419 = vdwg.mxu0
    %v420 = vsel %vm143, %v418, 0.0
    %421 = vadd.xlane.f32.xlu0 %v420
    %v422 = vpop.xlane.xlu0 %421
    %v423 = vmul.f32 %v422, %v176
    %v424 = vsub.f32 %v418, %v423
    %v425 = vmul.f32 %v424, %v424
    %v426 = vsel %vm143, %v425, 0.0
    %427 = vadd.xlane.f32.xlu0 %v426
    %v428 = vpop.xlane.xlu0 %427
    %v429 = vmul.f32 %v428, %v176
    %v430 = vadd.f32 %v429, 1e-05
    %v431 = vrsqrt.pop %v430
    %v432 = vmul.f32 %v431, %v430
    %v433 = vmul.f32 %v432, %v431
    %v434 = vmul.f32 0.5, %v433
    %v435 = vsub.f32 1.5, %v434
    %v436 = vmul.f32 %v431, %v435
    %vm437 = vweird.f32 %v430
    %vm438 = vweird.f32 %v431
    %vm439 = vmor %vm437, %vm438
    %v440 = vsel %vm439, %v431, %v436
    %v441 = vmul.f32 %v424, %v440
    %v442 = vmax.f32 %v441, 0.0
    %v443 = vld [vmem:[%s13] sm:$0xff]
    %v444 = vld [vmem:[%s13 + $0x8] sm:$0xff]
    %v445 = vld [vmem:[%s13 + $0x10] sm:$0xff]
    %v446 = vld [vmem:[%s13 + $0x18] sm:$0xff]
    %v447 = vld [vmem:[%s13 + $0x20] sm:$0xff]
    %v448 = vld [vmem:[%s13 + $0x28] sm:$0xff]
    %v449 = vld [vmem:[%s13 + $0x30] sm:$0xff]
    %v450 = vld [vmem:[%s13 + $0x38] sm:$0xff]
    %v451 = vld [vmem:[%s14] sm:$0x3]
    %v453 = vperm.slane %v451, 0
    %v454 = vperm.slane %v451, 1
    %v458 = vsel %vm143, %v442, 0
    %460 = vmatpush.msra.mxu0 0.0
    %461 = vmatpush.msra.mxu0 0.0
    %462 = vmatpush.msra.mxu0 0.0
    %463 = vmatpush.msra.mxu0 0.0
    %464 = vmatpush.msra.mxu0 0.0
    %465 = vmatpush.msra.mxu0 0.0
    %466 = vmatpush.msra.mxu0 0.0
    %467 = vmatpush.msra.mxu0 0.0
    %468 = vmatpush.msra.mxu0 0.0
    %469 = vmatpush.msra.mxu0 0.0
    %470 = vmatpush.msra.mxu0 0.0
    %471 = vmatpush.msra.mxu0 0.0
    %472 = vmatpush.msra.mxu0 %v449
    %473 = vmatpush.msra.mxu0 %v447
    %474 = vmatpush.msra.mxu0 %v445
    %475 = vmatpush.msra.mxu0 %v443
    %476 = vmatmul.f32.gmra.mxu0 %v458
    %v477 = vpop.f32.mrf.mxu0
    %v478 = vadd.f32 %v453, %v477
    %479 = vdwg.mxu0
    %480 = vmatpush.msra.mxu0 0.0
    %481 = vmatpush.msra.mxu0 0.0
    %482 = vmatpush.msra.mxu0 0.0
    %483 = vmatpush.msra.mxu0 0.0
    %484 = vmatpush.msra.mxu0 0.0
    %485 = vmatpush.msra.mxu0 0.0
    %486 = vmatpush.msra.mxu0 0.0
    %487 = vmatpush.msra.mxu0 0.0
    %488 = vmatpush.msra.mxu0 0.0
    %489 = vmatpush.msra.mxu0 0.0
    %490 = vmatpush.msra.mxu0 0.0
    %491 = vmatpush.msra.mxu0 0.0
    %492 = vmatpush.msra.mxu0 %v450
    %493 = vmatpush.msra.mxu0 %v448
    %494 = vmatpush.msra.mxu0 %v446
    %495 = vmatpush.msra.mxu0 %v444
    %496 = vmatmul.f32.gmra.mxu0 %v458
    %v497 = vpop.f32.mrf.mxu0
    %v498 = vadd.f32 %v454, %v497
    %499 = vdwg.mxu0
    %v500 = vmax.f32 %v498, 0.0
    %v501 = vand.u32 2147483647, %v498
    %v502 = vsub.f32 0.0, %v501
    %v503 = vmul.f32 %v502, 1.442695
    %v504 = vpow.pop %v503
    %v505 = vadd.f32 %v504, 1.0
    %v506 = vlog2.pop %v505
    %v507 = vmul.f32 %v506, 0.6931472
    %v508 = vmul.f32 -0.5, %v504
    %v509 = vadd.f32 %v508, 1.0
    %v510 = vmul.f32 %v509, %v504
    %v511 = vand.u32 2147483647, %v504
    %vm512 = vcmp.lt.f32.partialorder %v511, 0.0004427343
    %v513 = vsel %vm512, %v510, %v507
    %v514 = vadd.f32 %v500, %v513
    %v515 = vld [vmem:[#allocation7] sm:$0xff]
    %v516 = vmul.f32 %v514, %v515
    %v517 = vadd.f32 %v478, %v516
    %v518 = vmul.f32 %v517, 0.01
    %v519 = vadd.f32 %v325, %v518
    %v520 = vsub.f32 %v325, %v518
    %v521 = vld [vmem:[%s15] sm:$0xff]
    %v522 = vld [vmem:[%s15 + $0x8] sm:$0xff]
    %v523 = vld [vmem:[%s15 + $0x10] sm:$0xff]
    %v524 = vld [vmem:[%s15 + $0x18] sm:$0xff]
    %v525 = vld [vmem:[%s15 + $0x20] sm:$0xff]
    %v526 = vld [vmem:[%s15 + $0x28] sm:$0xff]
    %v527 = vld [vmem:[%s15 + $0x30] sm:$0xff]
    %v528 = vld [vmem:[%s15 + $0x38] sm:$0xff]
    %v529 = vld [vmem:[%s15 + $0x40] sm:$0xff]
    %v530 = vld [vmem:[%s15 + $0x48] sm:$0xff]
    %v531 = vld [vmem:[%s15 + $0x50] sm:$0xff]
    %v532 = vld [vmem:[%s15 + $0x58] sm:$0xff]
    %v533 = vld [vmem:[%s15 + $0x60] sm:$0xff]
    %v534 = vld [vmem:[%s15 + $0x68] sm:$0xff]
    %v535 = vld [vmem:[%s15 + $0x70] sm:$0xff]
    %v536 = vld [vmem:[%s15 + $0x78] sm:$0xff]
    %v537 = vld [vmem:[%s16] sm:$0x1]
    %v539 = vperm.slane %v537, 0
    %541 = vmatpush.msra.mxu0 %v536
    %542 = vmatpush.msra.mxu0 %v535
    %543 = vmatpush.msra.mxu0 %v534
    %544 = vmatpush.msra.mxu0 %v533
    %545 = vmatpush.msra.mxu0 %v532
    %546 = vmatpush.msra.mxu0 %v531
    %547 = vmatpush.msra.mxu0 %v530
    %548 = vmatpush.msra.mxu0 %v529
    %549 = vmatpush.msra.mxu0 %v528
    %550 = vmatpush.msra.mxu0 %v527
    %551 = vmatpush.msra.mxu0 %v526
    %552 = vmatpush.msra.mxu0 %v525
    %553 = vmatpush.msra.mxu0 %v524
    %554 = vmatpush.msra.mxu0 %v523
    %555 = vmatpush.msra.mxu0 %v522
    %556 = vmatpush.msra.mxu0 %v521
    %557 = vmatmul.f32.gmra.mxu0 %v325
    %v558 = vpop.f32.mrf.mxu0
    %v559 = vadd.f32 %v539, %v558
    %560 = vmatmul.f32.gmra.mxu0 %v519
    %v561 = vpop.f32.mrf.mxu0
    %v562 = vadd.f32 %v539, %v561
    %563 = vmatmul.f32.gmra.mxu0 %v520
    %v564 = vpop.f32.mrf.mxu0
    %v565 = vadd.f32 %v539, %v564
    %566 = vdwg.mxu0
    %v567 = vsel %vm143, %v559, 0.0
    %568 = vadd.xlane.f32.xlu0 %v567
    %v569 = vpop.xlane.xlu0 %568
    %v570 = vsel %vm143, %v562, 0.0
    %571 = vadd.xlane.f32.xlu0 %v570
    %v572 = vpop.xlane.xlu0 %571
    %v573 = vsel %vm143, %v565, 0.0
    %574 = vadd.xlane.f32.xlu0 %v573
    %v575 = vpop.xlane.xlu0 %574
    %v576 = vmul.f32 %v569, %v176
    %v577 = vmul.f32 %v572, %v176
    %v578 = vmul.f32 %v575, %v176
    %v579 = vsub.f32 %v559, %v576
    %v580 = vsub.f32 %v562, %v577
    %v581 = vsub.f32 %v565, %v578
    %v582 = vmul.f32 %v579, %v579
    %v583 = vmul.f32 %v580, %v580
    %v584 = vmul.f32 %v581, %v581
    %v585 = vsel %vm143, %v582, 0.0
    %586 = vadd.xlane.f32.xlu0 %v585
    %v587 = vpop.xlane.xlu0 %586
    %v588 = vsel %vm143, %v583, 0.0
    %589 = vadd.xlane.f32.xlu0 %v588
    %v590 = vpop.xlane.xlu0 %589
    %v591 = vsel %vm143, %v584, 0.0
    %592 = vadd.xlane.f32.xlu0 %v591
    %v593 = vpop.xlane.xlu0 %592
    %v594 = vmul.f32 %v587, %v176
    %v595 = vmul.f32 %v590, %v176
    %v596 = vmul.f32 %v593, %v176
    %v597 = vadd.f32 %v594, 1e-05
    %v598 = vadd.f32 %v595, 1e-05
    %v599 = vadd.f32 %v596, 1e-05
    %v600 = vrsqrt.pop %v597
    %v601 = vmul.f32 %v600, %v597
    %v602 = vmul.f32 %v601, %v600
    %v603 = vmul.f32 0.5, %v602
    %v604 = vsub.f32 1.5, %v603
    %v605 = vmul.f32 %v600, %v604
    %vm606 = vweird.f32 %v597
    %vm607 = vweird.f32 %v600
    %vm608 = vmor %vm606, %vm607
    %v609 = vsel %vm608, %v600, %v605
    %v610 = vrsqrt.pop %v598
    %v611 = vmul.f32 %v610, %v598
    %v612 = vmul.f32 %v611, %v610
    %v613 = vmul.f32 0.5, %v612
    %v614 = vsub.f32 1.5, %v613
    %v615 = vmul.f32 %v610, %v614
    %vm616 = vweird.f32 %v598
    %vm617 = vweird.f32 %v610
    %vm618 = vmor %vm616, %vm617
    %v619 = vsel %vm618, %v610, %v615
    %v620 = vrsqrt.pop %v599
    %v621 = vmul.f32 %v620, %v599
    %v622 = vmul.f32 %v621, %v620
    %v623 = vmul.f32 0.5, %v622
    %v624 = vsub.f32 1.5, %v623
    %v625 = vmul.f32 %v620, %v624
    %vm626 = vweird.f32 %v599
    %vm627 = vweird.f32 %v620
    %vm628 = vmor %vm626, %vm627
    %v629 = vsel %vm628, %v620, %v625
    %v630 = vmul.f32 %v579, %v609
    %v631 = vmul.f32 %v580, %v619
    %v632 = vmul.f32 %v581, %v629
    %v633 = vmax.f32 %v630, 0.0
    %v634 = vmax.f32 %v631, 0.0
    %v635 = vmax.f32 %v632, 0.0
    %v636 = vld [vmem:[%s17] sm:$0xff]
    %v637 = vld [vmem:[%s17 + $0x8] sm:$0xff]
    %v638 = vld [vmem:[%s17 + $0x10] sm:$0xff]
    %v639 = vld [vmem:[%s17 + $0x18] sm:$0xff]
    %v640 = vld [vmem:[%s18] sm:$0x1]
    %v642 = vperm.slane %v640, 0
    %v645 = vsel %vm143, %v633, 0
    %v648 = vsel %vm143, %v634, 0
    %v651 = vsel %vm143, %v635, 0
    %653 = vmatpush.msra.mxu0 0.0
    %654 = vmatpush.msra.mxu0 0.0
    %655 = vmatpush.msra.mxu0 0.0
    %656 = vmatpush.msra.mxu0 0.0
    %657 = vmatpush.msra.mxu0 0.0
    %658 = vmatpush.msra.mxu0 0.0
    %659 = vmatpush.msra.mxu0 0.0
    %660 = vmatpush.msra.mxu0 0.0
    %661 = vmatpush.msra.mxu0 0.0
    %662 = vmatpush.msra.mxu0 0.0
    %663 = vmatpush.msra.mxu0 0.0
    %664 = vmatpush.msra.mxu0 0.0
    %665 = vmatpush.msra.mxu0 %v639
    %666 = vmatpush.msra.mxu0 %v638
    %667 = vmatpush.msra.mxu0 %v637
    %668 = vmatpush.msra.mxu0 %v636
    %669 = vmatmul.f32.gmra.mxu0 %v645
    %v670 = vpop.f32.mrf.mxu0
    %v671 = vadd.f32 %v642, %v670
    %672 = vmatmul.f32.gmra.mxu0 %v648
    %v673 = vpop.f32.mrf.mxu0
    %v674 = vadd.f32 %v642, %v673
    %675 = vmatmul.f32.gmra.mxu0 %v651
    %v676 = vpop.f32.mrf.mxu0
    %v677 = vadd.f32 %v642, %v676
    %678 = vdwg.mxu0
    %v679 = vsel %vm143, %v671, 0.0
    %680 = vadd.xlane.f32.xlu0 %v679
    %v681 = vpop.xlane.xlu0 %680
    %v682 = vsel %vm143, %v674, 0.0
    %683 = vadd.xlane.f32.xlu0 %v682
    %v684 = vpop.xlane.xlu0 %683
    %v685 = vsel %vm143, %v677, 0.0
    %686 = vadd.xlane.f32.xlu0 %v685
    %v687 = vpop.xlane.xlu0 %686
    %v688 = vmul.f32 %v681, %v176
    %v689 = vmul.f32 %v684, %v176
    %v690 = vmul.f32 %v687, %v176
    %v691 = vsub.f32 %v671, %v688
    %v692 = vsub.f32 %v674, %v689
    %v693 = vsub.f32 %v677, %v690
    %v694 = vmul.f32 %v691, %v691
    %v695 = vmul.f32 %v692, %v692
    %v696 = vmul.f32 %v693, %v693
    %v697 = vsel %vm143, %v694, 0.0
    %698 = vadd.xlane.f32.xlu0 %v697
    %v699 = vpop.xlane.xlu0 %698
    %v700 = vsel %vm143, %v695, 0.0
    %701 = vadd.xlane.f32.xlu0 %v700
    %v702 = vpop.xlane.xlu0 %701
    %v703 = vsel %vm143, %v696, 0.0
    %704 = vadd.xlane.f32.xlu0 %v703
    %v705 = vpop.xlane.xlu0 %704
    %v706 = vmul.f32 %v699, %v176
    %v707 = vmul.f32 %v702, %v176
    %v708 = vmul.f32 %v705, %v176
    %v709 = vadd.f32 %v706, 1e-05
    %v710 = vadd.f32 %v707, 1e-05
    %v711 = vadd.f32 %v708, 1e-05
    %v712 = vrsqrt.pop %v709
    %v713 = vmul.f32 %v712, %v709
    %v714 = vmul.f32 %v713, %v712
    %v715 = vmul.f32 0.5, %v714
    %v716 = vsub.f32 1.5, %v715
    %v717 = vmul.f32 %v712, %v716
    %vm718 = vweird.f32 %v709
    %vm719 = vweird.f32 %v712
    %vm720 = vmor %vm718, %vm719
    %v721 = vsel %vm720, %v712, %v717
    %v722 = vrsqrt.pop %v710
    %v723 = vmul.f32 %v722, %v710
    %v724 = vmul.f32 %v723, %v722
    %v725 = vmul.f32 0.5, %v724
    %v726 = vsub.f32 1.5, %v725
    %v727 = vmul.f32 %v722, %v726
    %vm728 = vweird.f32 %v710
    %vm729 = vweird.f32 %v722
    %vm730 = vmor %vm728, %vm729
    %v731 = vsel %vm730, %v722, %v727
    %v732 = vrsqrt.pop %v711
    %v733 = vmul.f32 %v732, %v711
    %v734 = vmul.f32 %v733, %v732
    %v735 = vmul.f32 0.5, %v734
    %v736 = vsub.f32 1.5, %v735
    %v737 = vmul.f32 %v732, %v736
    %vm738 = vweird.f32 %v711
    %vm739 = vweird.f32 %v732
    %vm740 = vmor %vm738, %vm739
    %v741 = vsel %vm740, %v732, %v737
    %v742 = vmul.f32 %v691, %v721
    %v743 = vmul.f32 %v692, %v731
    %v744 = vmul.f32 %v693, %v741
    %v745 = vmax.f32 %v742, 0.0
    %v746 = vmax.f32 %v743, 0.0
    %v747 = vmax.f32 %v744, 0.0
    %v748 = vld [vmem:[%s19] sm:$0xff]
    %v749 = vld [vmem:[%s19 + $0x8] sm:$0xff]
    %v750 = vld [vmem:[%s19 + $0x10] sm:$0xff]
    %v751 = vld [vmem:[%s19 + $0x18] sm:$0xff]
    %v752 = vld [vmem:[%s20] sm:$0x1]
    %v754 = vperm.slane %v752, 0
    %v757 = vsel %vm143, %v745, 0
    %v760 = vsel %vm143, %v746, 0
    %v763 = vsel %vm143, %v747, 0
    %765 = vmatpush.msra.mxu0 0.0
    %766 = vmatpush.msra.mxu0 0.0
    %767 = vmatpush.msra.mxu0 0.0
    %768 = vmatpush.msra.mxu0 0.0
    %769 = vmatpush.msra.mxu0 0.0
    %770 = vmatpush.msra.mxu0 0.0
    %771 = vmatpush.msra.mxu0 0.0
    %772 = vmatpush.msra.mxu0 0.0
    %773 = vmatpush.msra.mxu0 0.0
    %774 = vmatpush.msra.mxu0 0.0
    %775 = vmatpush.msra.mxu0 0.0
    %776 = vmatpush.msra.mxu0 0.0
    %777 = vmatpush.msra.mxu0 %v751
    %778 = vmatpush.msra.mxu0 %v750
    %779 = vmatpush.msra.mxu0 %v749
    %780 = vmatpush.msra.mxu0 %v748
    %781 = vmatmul.f32.gmra.mxu0 %v757
    %v782 = vpop.f32.mrf.mxu0
    %v783 = vadd.f32 %v754, %v782
    %784 = vmatmul.f32.gmra.mxu0 %v760
    %v785 = vpop.f32.mrf.mxu0
    %v786 = vadd.f32 %v754, %v785
    %787 = vmatmul.f32.gmra.mxu0 %v763
    %v788 = vpop.f32.mrf.mxu0
    %v789 = vadd.f32 %v754, %v788
    %790 = vdwg.mxu0
    %v791 = vmax.f32 %v783, 0.0
    %v792 = vmax.f32 %v786, 0.0
    %v793 = vmax.f32 %v789, 0.0
    %v794 = vand.u32 2147483647, %v783
    %v795 = vand.u32 2147483647, %v786
    %v796 = vand.u32 2147483647, %v789
    %v797 = vsub.f32 0.0, %v794
    %v798 = vsub.f32 0.0, %v795
    %v799 = vsub.f32 0.0, %v796
    %v800 = vmul.f32 %v797, 1.442695
    %v801 = vpow.pop %v800
    %v802 = vmul.f32 %v798, 1.442695
    %v803 = vpow.pop %v802
    %v804 = vmul.f32 %v799, 1.442695
    %v805 = vpow.pop %v804
    %v806 = vadd.f32 %v801, 1.0
    %v807 = vlog2.pop %v806
    %v808 = vmul.f32 %v807, 0.6931472
    %v809 = vmul.f32 -0.5, %v801
    %v810 = vadd.f32 %v809, 1.0
    %v811 = vmul.f32 %v810, %v801
    %v812 = vand.u32 2147483647, %v801
    %vm813 = vcmp.lt.f32.partialorder %v812, 0.0004427343
    %v814 = vsel %vm813, %v811, %v808
    %v815 = vadd.f32 %v803, 1.0
    %v816 = vlog2.pop %v815
    %v817 = vmul.f32 %v816, 0.6931472
    %v818 = vmul.f32 -0.5, %v803
    %v819 = vadd.f32 %v818, 1.0
    %v820 = vmul.f32 %v819, %v803
    %v821 = vand.u32 2147483647, %v803
    %vm822 = vcmp.lt.f32.partialorder %v821, 0.0004427343
    %v823 = vsel %vm822, %v820, %v817
    %v824 = vadd.f32 %v805, 1.0
    %v825 = vlog2.pop %v824
    %v826 = vmul.f32 %v825, 0.6931472
    %v827 = vmul.f32 -0.5, %v805
    %v828 = vadd.f32 %v827, 1.0
    %v829 = vmul.f32 %v828, %v805
    %v830 = vand.u32 2147483647, %v805
    %vm831 = vcmp.lt.f32.partialorder %v830, 0.0004427343
    %v832 = vsel %vm831, %v829, %v826
    %v833 = vadd.f32 %v791, %v814
    %v834 = vadd.f32 %v792, %v823
    %v835 = vadd.f32 %v793, %v832
    %v836 = vsub.f32 %v834, %v835
    %v837 = vld [vmem:[%s21] sm:$0x1]
    %v839 = vperm.slane %v837, 0
    %v841 = vmul.f32 %v833, %v839
    %v842 = vadd.f32 %v836, %v841
    %v843 = vmax.f32 %v842, 0.0
    %v844 = vand.u32 2147483647, %v842
    %v845 = vsub.f32 0.0, %v844
    %v846 = vmul.f32 %v845, 1.442695
    %v847 = vpow.pop %v846
    %v848 = vadd.f32 %v847, 1.0
    %v849 = vlog2.pop %v848
    %v850 = vmul.f32 %v849, 0.6931472
    %v851 = vmul.f32 -0.5, %v847
    %v852 = vadd.f32 %v851, 1.0
    %v853 = vmul.f32 %v852, %v847
    %v854 = vand.u32 2147483647, %v847
    %vm855 = vcmp.lt.f32.partialorder %v854, 0.0004427343
    %v856 = vsel %vm855, %v853, %v850
    %v857 = vadd.f32 %v843, %v856
    %v858 = vld [vmem:[%s22] sm:$0x1]
    %v860 = vperm.slane %v858, 0
    %v862 = vmul.f32 %v857, %v860
    %863 = vst [vmem:[#allocation10] sm:$0xff] %v325
    %864 = vst [vmem:[#allocation10 + $0x8] sm:$0xff] %v518
    %865 = vst [vmem:[#allocation10 + $0x10] sm:$0xff] %v286
    %866 = vst [vmem:[#allocation10 + $0x18] sm:$0xff] %v322
    %867 = vst [vmem:[#allocation10 + $0x20] sm:$0xff] %v478
    %868 = vst [vmem:[#allocation10 + $0x28] sm:$0xff] %v514
    %869 = vst [vmem:[#allocation11] sm:$0xff] %v833
    %870 = vst [vmem:[#allocation13] sm:$0xff] %v862
    // Predicated region
    $region110: #{tpu_custom_call.1} parent=1 // pred_check
      _
    $region111: #{tpu_custom_call.1} parent=1 // pred_check_branch
      %872 = sbr.rel (0) target = $region113
    $region112: #{tpu_custom_call.1} parent=1 // pred_region
      %874 = vsyncadd [#allocation4], 0
      %s876 = sshll.u32 [#allocation10], 4
      %s877 = int_to_ptr.vmem [resolvable:$true] %s876
      %s878 = sshll.u32 %s23, 4
      %s879 = int_to_ptr.hbm [resolvable:$true] %s878
      %881 = dma.vmem_to_hbm [thread:$0]  %s877, 768, %s879, [#allocation4]
    $region113: #{tpu_custom_call.1} parent=1 // pred_fallthru
      _
    // Predicated region
    $region114: #{tpu_custom_call.1} parent=1 // pred_check
      _
    $region115: #{tpu_custom_call.1} parent=1 // pred_check_branch
      %883 = sbr.rel (0) target = $region117
    $region116: #{tpu_custom_call.1} parent=1 // pred_region
      %885 = vsyncadd [#allocation12], 0
      %s887 = sshll.u32 [#allocation11], 4
      %s888 = int_to_ptr.vmem [resolvable:$true] %s887
      %s889 = sshll.u32 %s24, 4
      %s890 = int_to_ptr.hbm [resolvable:$true] %s889
      %892 = dma.vmem_to_hbm [thread:$0]  %s888, 128, %s890, [#allocation12]
    $region117: #{tpu_custom_call.1} parent=1 // pred_fallthru
      _
    // Predicated region
    $region118: #{tpu_custom_call.1} parent=1 // pred_check
      _
    $region119: #{tpu_custom_call.1} parent=1 // pred_check_branch
      %894 = sbr.rel (0) target = $region121
    $region120: #{tpu_custom_call.1} parent=1 // pred_region
      %896 = vsyncadd [#allocation12], 0
      %s898 = sshll.u32 [#allocation13], 4
      %s899 = int_to_ptr.vmem [resolvable:$true] %s898
      %s900 = sshll.u32 %s25, 4
      %s901 = int_to_ptr.hbm [resolvable:$true] %s900
      %903 = dma.vmem_to_hbm [thread:$0]  %s899, 128, %s901, [#allocation12]
    $region121: #{tpu_custom_call.1} parent=1 // pred_fallthru
      _
    // Predicated region
    $region122: #{tpu_custom_call.1} parent=1 // pred_check
      _
    $region123: #{tpu_custom_call.1} parent=1 // pred_check_branch
      %905 = sbr.rel (0) target = $region125
    $region124: #{tpu_custom_call.1} parent=1 // pred_region
      %907 = dma.done [#allocation4], 768
    $region125: #{tpu_custom_call.1} parent=1 // pred_fallthru
      _
    // Predicated region
    $region126: #{tpu_custom_call.1} parent=1 // pred_check
      _
    $region127: #{tpu_custom_call.1} parent=1 // pred_check_branch
      %909 = sbr.rel (0) target = $region129
    $region128: #{tpu_custom_call.1} parent=1 // pred_region
      %911 = dma.done [#allocation12], 128
    $region129: #{tpu_custom_call.1} parent=1 // pred_fallthru
      _
    // Predicated region
    $region130: #{tpu_custom_call.1} parent=1 // pred_check
      _
    $region131: #{tpu_custom_call.1} parent=1 // pred_check_branch
      %913 = sbr.rel (0) target = $region133
    $region132: #{tpu_custom_call.1} parent=1 // pred_region
      %915 = dma.done [#allocation12], 128
    $region133: #{tpu_custom_call.1} parent=1 // pred_fallthru
      _
    %916 = vsyncpa [#allocation3], 1
    %917 = vsyncpa [#allocation6], 1
    %918 = vsyncpa [#allocation9], 1
    %919 = vsyncpa [#allocation4], 1
    %920 = vsyncpa [#allocation12], 1

</llo_original>
